<compile_context>
chip_gen: v7x
topology: tpu7x:2x2x1
jax: 0.10.0
libtpu: 0.0.40
codegen_flags: <defaults>
</compile_context>

<pallas_src>
import jax
import jax.numpy as jnp
from jax.experimental import pallas as pl
from jax.experimental.pallas import tpu as pltpu

# ----------------------------- configuration -------------------------------
B = 2            # batch
L = 8            # sequence length
D = 32           # embedding dim
S_DIM = 16       # structured-feature dim (input `s`)
T_DIM = 16       # text-feature dim (input `text`)
H = 32           # hidden dim
C = 4            # num classes
V1 = 50          # vocab for embbedding1
V2 = 50          # vocab for embbedding2
V_PAD = 64       # vocab padded to a sublane-friendly size for in-kernel gather
STEPS = 2        # model._steps
STEPS2 = 2       # model._steps2
K_SELECT = sum(4 + i for i in range(STEPS2))   # number of "select" edges (= 9)

PRIMITIVES1 = ('identity', 'relu', 'tanh', 'sigmoid')   # s / s2 cells
PRIMITIVES2 = ('identity', 'relu', 'tanh', 'sigmoid')   # x1 / x2 cells
PRIMITIVES3 = ('identity', 'relu', 'tanh', 'zero')      # fuse "select" edges
PRIMITIVES4 = ('relu', 'tanh', 'sigmoid', 'identity')   # fuse combine ops

_OPS = {
    'identity': lambda x: x,
    'relu': lambda x: jnp.maximum(x, 0.0),
    'tanh': jnp.tanh,
    'sigmoid': jax.nn.sigmoid,
    'zero': lambda x: jnp.zeros_like(x),
}

# row offsets of each alpha group inside the packed (N_ALPHA, 4) table
ROW_S = 0
ROW_S2 = ROW_S + STEPS
ROW_X1 = ROW_S2 + STEPS
ROW_X2 = ROW_X1 + STEPS
ROW_SEL = ROW_X2 + STEPS
ROW_FUSE = ROW_SEL + K_SELECT
N_ALPHA = ROW_FUSE + STEPS2          # = 19

_VMEM = pl.BlockSpec(memory_space=pltpu.MemorySpace.VMEM)
_SMEM = pl.BlockSpec(memory_space=pltpu.MemorySpace.SMEM)


# ---------------------------- fused Pallas kernel ---------------------------
def _fused_forward_kernel(x1_ref, x2_ref, st_ref, emb1_ref, emb2_ref,
                          wproj_ref, bproj_ref, wpost_ref, bpost_ref,
                          alpha_ref, combw_ref, combb_ref, clsw_ref, clsb_ref,
                          o_ref, cat_ref):
    # ---- architecture-alpha softmax: all 19 rows in one (19,4) VPU/EUP op ----
    a = alpha_ref[...]
    a = a - jnp.max(a, axis=-1, keepdims=True)
    ea = jnp.exp(a)
    w_all = ea / jnp.sum(ea, axis=-1, keepdims=True)        # (N_ALPHA, 4)

    def wsel(row, j):
        # (1,1) tile; broadcast-multiplied against the state
        return w_all[row:row + 1, j:j + 1]

    def mixed(x, row, prims):
        # weighted sum of candidate elementwise ops; all four candidates in one
        # body so VPU ops co-issue under the EUP (tanh/sigmoid) latency.
        acc = None
        for j, p in enumerate(prims):
            if p == 'zero':
                continue                                     # contributes nothing
            term = wsel(row, j) * _OPS[p](x)
            acc = term if acc is None else acc + term
        return acc

    # ---- embeddings: one-hot matmul gather, tables resident in VMEM ----
    iota_v = jax.lax.broadcasted_iota(jnp.int32, (B * L, V_PAD), 1)
    oh1 = (iota_v == x1_ref[...]).astype(jnp.float32)        # (B*L, V_PAD)
    oh2 = (iota_v == x2_ref[...]).astype(jnp.float32)
    x1e = jnp.dot(oh1, emb1_ref[...], preferred_element_type=jnp.float32)  # (B*L, D)
    x2e = jnp.dot(oh2, emb2_ref[...], preferred_element_type=jnp.float32)  # (B*L, D)
    # TODO(synk): dropout1 / dropout2 are identity at inference and omitted.

    # ---- s / text projections: ONE lane-dense block-diagonal matmul ----
    proj = jnp.dot(st_ref[...], wproj_ref[...],
                   preferred_element_type=jnp.float32) + bproj_ref[...]
    proj = jnp.maximum(proj, 0.0)                            # (B, 2H)
    s_h = proj[:, 0:H]
    s2_h = proj[:, H:2 * H]

    # ---- NAS cells: chained mixed ops, all states stay in vregs ----
    # TODO(synk): model.cell_* internals are not in the provided source; a
    #             DARTS-style chain of mixed elementwise ops is synthesized.
    cs, cs2, cx1, cx2 = s_h, s2_h, x1e, x2e
    for i in range(STEPS):
        cs = mixed(cs, ROW_S + i, PRIMITIVES1)
        cs2 = mixed(cs2, ROW_S2 + i, PRIMITIVES1)
        cx1 = mixed(cx1, ROW_X1 + i, PRIMITIVES2)
        cx2 = mixed(cx2, ROW_X2 + i, PRIMITIVES2)

    # ---- mean pooling over L folded in as a tiny (B, B*L) matmul ----
    row_id = jax.lax.broadcasted_iota(jnp.int32, (B, B * L), 0)
    col_id = jax.lax.broadcasted_iota(jnp.int32, (B, B * L), 1)
    lo = row_id * L
    poolm = ((col_id >= lo) & (col_id < lo + L)).astype(jnp.float32) * (1.0 / L)
    px1 = jnp.dot(poolm, cx1, preferred_element_type=jnp.float32)   # (B, D)
    px2 = jnp.dot(poolm, cx2, preferred_element_type=jnp.float32)   # (B, D)

    # ---- four post-cell linears as ONE 128-lane-wide block-diagonal matmul ----
    cat_ref[:, 0 * H:1 * H] = cs
    cat_ref[:, 1 * H:2 * H] = px1
    cat_ref[:, 2 * H:3 * H] = px2
    cat_ref[:, 3 * H:4 * H] = cs2
    post = jnp.dot(cat_ref[...], wpost_ref[...],
                   preferred_element_type=jnp.float32) + bpost_ref[...]
    post = jnp.maximum(post, 0.0)                            # (B, 4H) lane-dense
    f_s = post[:, 0 * H:1 * H]
    f_x1 = post[:, 1 * H:2 * H]
    f_x2 = post[:, 2 * H:3 * H]
    f_s2 = post[:, 3 * H:4 * H]

    # ---- fusion cell (DARTS-style select edges + combine op per step) ----
    states = [f_s, f_x1, f_x2, f_s2]
    off = ROW_SEL
    for i in range(STEPS2):
        contrib = None
        for j, h in enumerate(states):
            sel = mixed(h, off + j, PRIMITIVES3)
            contrib = sel if contrib is None else contrib + sel
        off += len(states)
        states.append(mixed(contrib, ROW_FUSE + i, PRIMITIVES4))

    # ---- Linear(steps2 -> 1) combine over the last STEPS2 states ----
    out = states[-STEPS2] * combw_ref[0]
    for i in range(1, STEPS2):
        out = out + states[-STEPS2 + i] * combw_ref[i]
    out = out + combb_ref[0]                                 # (B, H)

    # ---- classifier + softmax (approx reciprocal -> EUP slot) ----
    logits = jnp.dot(out, clsw_ref[...],
                     preferred_element_type=jnp.float32) + clsb_ref[...]
    m = jnp.max(logits, axis=-1, keepdims=True)
    e = jnp.exp(logits - m)
    o_ref[...] = e * pl.reciprocal(jnp.sum(e, axis=-1, keepdims=True), approx=True)


# ------------------------------- model glue ---------------------------------
def init_params(key):
    ks = jax.random.split(key, 20)
    p = {}
    p['emb1'] = jax.random.normal(ks[0], (V1, D), jnp.float32) * 0.1
    p['emb2'] = jax.random.normal(ks[1], (V2, D), jnp.float32) * 0.1
    p['linear_w'] = jax.random.normal(ks[2], (S_DIM, H), jnp.float32) * 0.1
    p['linear_b'] = jnp.zeros((H,), jnp.float32)
    p['note_w'] = jax.random.normal(ks[3], (T_DIM, H), jnp.float32) * 0.1
    p['note_b'] = jnp.zeros((H,), jnp.float32)
    p['lx1_w'] = jax.random.normal(ks[4], (D, H), jnp.float32) * 0.1
    p['lx1_b'] = jnp.zeros((H,), jnp.float32)
    p['lx2_w'] = jax.random.normal(ks[5], (D, H), jnp.float32) * 0.1
    p['lx2_b'] = jnp.zeros((H,), jnp.float32)
    p['ls_w'] = jax.random.normal(ks[6], (H, H), jnp.float32) * 0.1
    p['ls_b'] = jnp.zeros((H,), jnp.float32)
    p['ls2_w'] = jax.random.normal(ks[7], (H, H), jnp.float32) * 0.1
    p['ls2_b'] = jnp.zeros((H,), jnp.float32)
    p['combine_w'] = jax.random.normal(ks[8], (STEPS2,), jnp.float32) * 0.5
    p['combine_b'] = jnp.zeros((1,), jnp.float32)
    p['cls_w'] = jax.random.normal(ks[9], (H, C), jnp.float32) * 0.1
    p['cls_b'] = jnp.zeros((C,), jnp.float32)
    # architecture alphas (as held by Network_prune.proj_weights)
    p['alpha_s'] = jax.random.normal(ks[10], (STEPS, len(PRIMITIVES1)), jnp.float32)
    p['alpha_s2'] = jax.random.normal(ks[11], (STEPS, len(PRIMITIVES1)), jnp.float32)
    p['alpha_x1'] = jax.random.normal(ks[12], (STEPS, len(PRIMITIVES2)), jnp.float32)
    p['alpha_x2'] = jax.random.normal(ks[13], (STEPS, len(PRIMITIVES2)), jnp.float32)
    p['alpha_sel'] = jax.random.normal(ks[14], (K_SELECT, len(PRIMITIVES3)), jnp.float32)
    p['alpha_fuse'] = jax.random.normal(ks[15], (STEPS2, len(PRIMITIVES4)), jnp.float32)
    return p


def _pack(params, x1, x2, s, text):
    """Host-side layout plumbing only (concat / block-diag / pad). No compute."""
    emb1_p = jnp.zeros((V_PAD, D), jnp.float32).at[:V1].set(params['emb1'])
    emb2_p = jnp.zeros((V_PAD, D), jnp.float32).at[:V2].set(params['emb2'])
    wproj = jax.scipy.linalg.block_diag(params['linear_w'], params['note_w'])   # (32, 64)
    bproj = jnp.concatenate([params['linear_b'], params['note_b']]).reshape(1, 2 * H)
    wpost = jax.scipy.linalg.block_diag(params['ls_w'], params['lx1_w'],
                                        params['lx2_w'], params['ls2_w'])       # (128, 128)
    bpost = jnp.concatenate([params['ls_b'], params['lx1_b'],
                             params['lx2_b'], params['ls2_b']]).reshape(1, 4 * H)
    alphas = jnp.concatenate([params['alpha_s'], params['alpha_s2'],
                              params['alpha_x1'], params['alpha_x2'],
                              params['alpha_sel'], params['alpha_fuse']],
                             axis=0)                                            # (19, 4)
    st = jnp.concatenate([s, text], axis=1)                                     # (B, 32)
    return (x1.reshape(B * L, 1).astype(jnp.int32),
            x2.reshape(B * L, 1).astype(jnp.int32),
            st, emb1_p, emb2_p, wproj, bproj, wpost, bpost, alphas,
            params['combine_w'], params['combine_b'],
            params['cls_w'], params['cls_b'].reshape(1, C))


@jax.jit
def network_prune_forward(params, x1, x2, s, text):
    args = _pack(params, x1, x2, s, text)
    return pl.pallas_call(
        _fused_forward_kernel,
        out_shape=jax.ShapeDtypeStruct((B, C), jnp.float32),
        in_specs=[_VMEM] * 10 + [_SMEM, _SMEM] + [_VMEM] * 2,
        out_specs=_VMEM,
        scratch_shapes=[pltpu.VMEM((B, 4 * H), jnp.float32)],   # concat staging tile
        compiler_params=pltpu.CompilerParams(vmem_limit_bytes=8 * 1024 * 1024),
    )(*args)


# ----------------------------------- main -----------------------------------
if __name__ == "__main__":
    key = jax.random.PRNGKey(0)
    kp, k1, k2, k3, k4 = jax.random.split(key, 5)

    params = init_params(kp)
    x1 = jax.random.randint(k1, (B, L), 0, V1, dtype=jnp.int32)
    x2 = jax.random.randint(k2, (B, L), 0, V2, dtype=jnp.int32)
    s = jax.random.normal(k3, (B, S_DIM), jnp.float32)
    text = jax.random.normal(k4, (B, T_DIM), jnp.float32)

    out = network_prune_forward(params, x1, x2, s, text)
    out = jax.block_until_ready(out)

    assert out.shape == (B, C)
    assert bool(jnp.all(jnp.isfinite(out)))
    # rows of the softmax output must sum to ~1 (approx reciprocal -> loose tol)
    assert bool(jnp.allclose(jnp.sum(out, axis=-1), 1.0, atol=5e-3))
    print("KERNEL_OK")
</pallas_src>

<mosaic_0001>
module attributes {stable_mosaic.version = 11 : i64} {
  func.func @_fused_forward_kernel(%arg0: memref<16x1xi32, #tpu.memory_space<vmem>>, %arg1: memref<16x1xi32, #tpu.memory_space<vmem>>, %arg2: memref<2x32xf32, #tpu.memory_space<vmem>>, %arg3: memref<64x32xf32, #tpu.memory_space<vmem>>, %arg4: memref<64x32xf32, #tpu.memory_space<vmem>>, %arg5: memref<32x64xf32, #tpu.memory_space<vmem>>, %arg6: memref<1x64xf32, #tpu.memory_space<vmem>>, %arg7: memref<128x128xf32, #tpu.memory_space<vmem>>, %arg8: memref<1x128xf32, #tpu.memory_space<vmem>>, %arg9: memref<19x4xf32, #tpu.memory_space<vmem>>, %arg10: memref<2xf32, #tpu.memory_space<smem>>, %arg11: memref<1xf32, #tpu.memory_space<smem>>, %arg12: memref<32x4xf32, #tpu.memory_space<vmem>>, %arg13: memref<1x4xf32, #tpu.memory_space<vmem>>, %arg14: memref<2x4xf32, #tpu.memory_space<vmem>>, %arg15: memref<2x128xf32, #tpu.memory_space<vmem>>) attributes {dimension_semantics = [], scalar_prefetch = 0 : i64, scratch_operands = 1 : i64, tpu.core_type = #tpu.core_type<tc>} {
    %c0 = arith.constant 0 : index
    %c0_0 = arith.constant 0 : index
    %0 = vector.load %arg9[%c0, %c0_0] : memref<19x4xf32, #tpu.memory_space<vmem>>, vector<19x4xf32>
    %cst = arith.constant dense<0xFF800000> : vector<19xf32>
    %1 = vector.multi_reduction <maximumf>, %0, %cst [1] : vector<19x4xf32> to vector<19xf32>
    %2 = vector.shape_cast %1 : vector<19xf32> to vector<19x1xf32>
    %3 = vector.broadcast %2 : vector<19x1xf32> to vector<19x4xf32>
    %4 = arith.subf %0, %3 : vector<19x4xf32>
    %5 = math.exp %4 : vector<19x4xf32>
    %cst_1 = arith.constant dense<0.000000e+00> : vector<19xf32>
    %6 = vector.multi_reduction <add>, %5, %cst_1 [1] : vector<19x4xf32> to vector<19xf32>
    %7 = vector.shape_cast %6 : vector<19xf32> to vector<19x1xf32>
    %8 = vector.broadcast %7 : vector<19x1xf32> to vector<19x4xf32>
    %9 = arith.divf %5, %8 : vector<19x4xf32>
    %10 = tpu.iota {dimensions = array<i32: 1>} : vector<16x64xi32>
    %c0_2 = arith.constant 0 : index
    %c0_3 = arith.constant 0 : index
    %11 = vector.load %arg0[%c0_2, %c0_3] : memref<16x1xi32, #tpu.memory_space<vmem>>, vector<16x1xi32>
    %12 = vector.broadcast %11 : vector<16x1xi32> to vector<16x64xi32>
    %13 = arith.cmpi eq, %10, %12 : vector<16x64xi32>
    %14 = arith.extui %13 : vector<16x64xi1> to vector<16x64xi32>
    %15 = arith.sitofp %14 : vector<16x64xi32> to vector<16x64xf32>
    %c0_4 = arith.constant 0 : index
    %c0_5 = arith.constant 0 : index
    %16 = vector.load %arg1[%c0_4, %c0_5] : memref<16x1xi32, #tpu.memory_space<vmem>>, vector<16x1xi32>
    %17 = vector.broadcast %16 : vector<16x1xi32> to vector<16x64xi32>
    %18 = arith.cmpi eq, %10, %17 : vector<16x64xi32>
    %19 = arith.extui %18 : vector<16x64xi1> to vector<16x64xi32>
    %20 = arith.sitofp %19 : vector<16x64xi32> to vector<16x64xf32>
    %c0_6 = arith.constant 0 : index
    %c0_7 = arith.constant 0 : index
    %21 = vector.load %arg3[%c0_6, %c0_7] : memref<64x32xf32, #tpu.memory_space<vmem>>, vector<64x32xf32>
    %cst_8 = arith.constant dense<0.000000e+00> : vector<16x32xf32>
    %22 = tpu.matmul %15, %21, %cst_8 {dimension_numbers = #tpu.dot_dimension_numbers<[1], [0], [0], [1], [0, 0, 1, 1], [], []>} : vector<16x64xf32>, vector<64x32xf32>, vector<16x32xf32> -> vector<16x32xf32>
    %c0_9 = arith.constant 0 : index
    %c0_10 = arith.constant 0 : index
    %23 = vector.load %arg4[%c0_9, %c0_10] : memref<64x32xf32, #tpu.memory_space<vmem>>, vector<64x32xf32>
    %cst_11 = arith.constant dense<0.000000e+00> : vector<16x32xf32>
    %24 = tpu.matmul %20, %23, %cst_11 {dimension_numbers = #tpu.dot_dimension_numbers<[1], [0], [0], [1], [0, 0, 1, 1], [], []>} : vector<16x64xf32>, vector<64x32xf32>, vector<16x32xf32> -> vector<16x32xf32>
    %c0_12 = arith.constant 0 : index
    %c0_13 = arith.constant 0 : index
    %25 = vector.load %arg2[%c0_12, %c0_13] : memref<2x32xf32, #tpu.memory_space<vmem>>, vector<2x32xf32>
    %c0_14 = arith.constant 0 : index
    %c0_15 = arith.constant 0 : index
    %26 = vector.load %arg5[%c0_14, %c0_15] : memref<32x64xf32, #tpu.memory_space<vmem>>, vector<32x64xf32>
    %cst_16 = arith.constant dense<0.000000e+00> : vector<2x64xf32>
    %27 = tpu.matmul %25, %26, %cst_16 {dimension_numbers = #tpu.dot_dimension_numbers<[1], [0], [0], [1], [0, 0, 1, 1], [], []>} : vector<2x32xf32>, vector<32x64xf32>, vector<2x64xf32> -> vector<2x64xf32>
    %c0_17 = arith.constant 0 : index
    %c0_18 = arith.constant 0 : index
    %28 = vector.load %arg6[%c0_17, %c0_18] : memref<1x64xf32, #tpu.memory_space<vmem>>, vector<1x64xf32>
    %29 = vector.broadcast %28 : vector<1x64xf32> to vector<2x64xf32>
    %30 = arith.addf %27, %29 : vector<2x64xf32>
    %cst_19 = arith.constant 0.000000e+00 : f32
    %31 = vector.broadcast %cst_19 : f32 to vector<2x64xf32>
    %32 = arith.maximumf %30, %31 : vector<2x64xf32>
    %33 = vector.extract_strided_slice %32 {offsets = [0, 0], sizes = [2, 32], strides = [1, 1]} : vector<2x64xf32> to vector<2x32xf32>
    %34 = vector.extract_strided_slice %32 {offsets = [0, 32], sizes = [2, 32], strides = [1, 1]} : vector<2x64xf32> to vector<2x32xf32>
    %35 = vector.extract_strided_slice %9 {offsets = [0, 0], sizes = [1, 1], strides = [1, 1]} : vector<19x4xf32> to vector<1x1xf32>
    %36 = vector.broadcast %35 : vector<1x1xf32> to vector<2x32xf32>
    %37 = arith.mulf %36, %33 : vector<2x32xf32>
    %38 = vector.extract_strided_slice %9 {offsets = [0, 1], sizes = [1, 1], strides = [1, 1]} : vector<19x4xf32> to vector<1x1xf32>
    %cst_20 = arith.constant 0.000000e+00 : f32
    %39 = vector.broadcast %cst_20 : f32 to vector<2x32xf32>
    %40 = arith.maximumf %33, %39 : vector<2x32xf32>
    %41 = vector.broadcast %38 : vector<1x1xf32> to vector<2x32xf32>
    %42 = arith.mulf %41, %40 : vector<2x32xf32>
    %43 = arith.addf %37, %42 : vector<2x32xf32>
    %44 = vector.extract_strided_slice %9 {offsets = [0, 2], sizes = [1, 1], strides = [1, 1]} : vector<19x4xf32> to vector<1x1xf32>
    %45 = math.tanh %33 : vector<2x32xf32>
    %46 = vector.broadcast %44 : vector<1x1xf32> to vector<2x32xf32>
    %47 = arith.mulf %46, %45 : vector<2x32xf32>
    %48 = arith.addf %43, %47 : vector<2x32xf32>
    %49 = vector.extract_strided_slice %9 {offsets = [0, 3], sizes = [1, 1], strides = [1, 1]} : vector<19x4xf32> to vector<1x1xf32>
    %50 = arith.negf %33 : vector<2x32xf32>
    %51 = math.exp %50 : vector<2x32xf32>
    %cst_21 = arith.constant 1.000000e+00 : f32
    %52 = vector.broadcast %cst_21 : f32 to vector<2x32xf32>
    %53 = arith.addf %52, %51 : vector<2x32xf32>
    %54 = arith.divf %52, %53 : vector<2x32xf32>
    %55 = vector.broadcast %49 : vector<1x1xf32> to vector<2x32xf32>
    %56 = arith.mulf %55, %54 : vector<2x32xf32>
    %57 = arith.addf %48, %56 : vector<2x32xf32>
    %58 = vector.extract_strided_slice %9 {offsets = [2, 0], sizes = [1, 1], strides = [1, 1]} : vector<19x4xf32> to vector<1x1xf32>
    %59 = vector.broadcast %58 : vector<1x1xf32> to vector<2x32xf32>
    %60 = arith.mulf %59, %34 : vector<2x32xf32>
    %61 = vector.extract_strided_slice %9 {offsets = [2, 1], sizes = [1, 1], strides = [1, 1]} : vector<19x4xf32> to vector<1x1xf32>
    %cst_22 = arith.constant 0.000000e+00 : f32
    %62 = vector.broadcast %cst_22 : f32 to vector<2x32xf32>
    %63 = arith.maximumf %34, %62 : vector<2x32xf32>
    %64 = vector.broadcast %61 : vector<1x1xf32> to vector<2x32xf32>
    %65 = arith.mulf %64, %63 : vector<2x32xf32>
    %66 = arith.addf %60, %65 : vector<2x32xf32>
    %67 = vector.extract_strided_slice %9 {offsets = [2, 2], sizes = [1, 1], strides = [1, 1]} : vector<19x4xf32> to vector<1x1xf32>
    %68 = math.tanh %34 : vector<2x32xf32>
    %69 = vector.broadcast %67 : vector<1x1xf32> to vector<2x32xf32>
    %70 = arith.mulf %69, %68 : vector<2x32xf32>
    %71 = arith.addf %66, %70 : vector<2x32xf32>
    %72 = vector.extract_strided_slice %9 {offsets = [2, 3], sizes = [1, 1], strides = [1, 1]} : vector<19x4xf32> to vector<1x1xf32>
    %73 = arith.negf %34 : vector<2x32xf32>
    %74 = math.exp %73 : vector<2x32xf32>
    %cst_23 = arith.constant 1.000000e+00 : f32
    %75 = vector.broadcast %cst_23 : f32 to vector<2x32xf32>
    %76 = arith.addf %75, %74 : vector<2x32xf32>
    %77 = arith.divf %75, %76 : vector<2x32xf32>
    %78 = vector.broadcast %72 : vector<1x1xf32> to vector<2x32xf32>
    %79 = arith.mulf %78, %77 : vector<2x32xf32>
    %80 = arith.addf %71, %79 : vector<2x32xf32>
    %81 = vector.extract_strided_slice %9 {offsets = [4, 0], sizes = [1, 1], strides = [1, 1]} : vector<19x4xf32> to vector<1x1xf32>
    %82 = vector.broadcast %81 : vector<1x1xf32> to vector<16x32xf32>
    %83 = arith.mulf %82, %22 : vector<16x32xf32>
    %84 = vector.extract_strided_slice %9 {offsets = [4, 1], sizes = [1, 1], strides = [1, 1]} : vector<19x4xf32> to vector<1x1xf32>
    %cst_24 = arith.constant 0.000000e+00 : f32
    %85 = vector.broadcast %cst_24 : f32 to vector<16x32xf32>
    %86 = arith.maximumf %22, %85 : vector<16x32xf32>
    %87 = vector.broadcast %84 : vector<1x1xf32> to vector<16x32xf32>
    %88 = arith.mulf %87, %86 : vector<16x32xf32>
    %89 = arith.addf %83, %88 : vector<16x32xf32>
    %90 = vector.extract_strided_slice %9 {offsets = [4, 2], sizes = [1, 1], strides = [1, 1]} : vector<19x4xf32> to vector<1x1xf32>
    %91 = math.tanh %22 : vector<16x32xf32>
    %92 = vector.broadcast %90 : vector<1x1xf32> to vector<16x32xf32>
    %93 = arith.mulf %92, %91 : vector<16x32xf32>
    %94 = arith.addf %89, %93 : vector<16x32xf32>
    %95 = vector.extract_strided_slice %9 {offsets = [4, 3], sizes = [1, 1], strides = [1, 1]} : vector<19x4xf32> to vector<1x1xf32>
    %96 = arith.negf %22 : vector<16x32xf32>
    %97 = math.exp %96 : vector<16x32xf32>
    %cst_25 = arith.constant 1.000000e+00 : f32
    %98 = vector.broadcast %cst_25 : f32 to vector<16x32xf32>
    %99 = arith.addf %98, %97 : vector<16x32xf32>
    %100 = arith.divf %98, %99 : vector<16x32xf32>
    %101 = vector.broadcast %95 : vector<1x1xf32> to vector<16x32xf32>
    %102 = arith.mulf %101, %100 : vector<16x32xf32>
    %103 = arith.addf %94, %102 : vector<16x32xf32>
    %104 = vector.extract_strided_slice %9 {offsets = [6, 0], sizes = [1, 1], strides = [1, 1]} : vector<19x4xf32> to vector<1x1xf32>
    %105 = vector.broadcast %104 : vector<1x1xf32> to vector<16x32xf32>
    %106 = arith.mulf %105, %24 : vector<16x32xf32>
    %107 = vector.extract_strided_slice %9 {offsets = [6, 1], sizes = [1, 1], strides = [1, 1]} : vector<19x4xf32> to vector<1x1xf32>
    %cst_26 = arith.constant 0.000000e+00 : f32
    %108 = vector.broadcast %cst_26 : f32 to vector<16x32xf32>
    %109 = arith.maximumf %24, %108 : vector<16x32xf32>
    %110 = vector.broadcast %107 : vector<1x1xf32> to vector<16x32xf32>
    %111 = arith.mulf %110, %109 : vector<16x32xf32>
    %112 = arith.addf %106, %111 : vector<16x32xf32>
    %113 = vector.extract_strided_slice %9 {offsets = [6, 2], sizes = [1, 1], strides = [1, 1]} : vector<19x4xf32> to vector<1x1xf32>
    %114 = math.tanh %24 : vector<16x32xf32>
    %115 = vector.broadcast %113 : vector<1x1xf32> to vector<16x32xf32>
    %116 = arith.mulf %115, %114 : vector<16x32xf32>
    %117 = arith.addf %112, %116 : vector<16x32xf32>
    %118 = vector.extract_strided_slice %9 {offsets = [6, 3], sizes = [1, 1], strides = [1, 1]} : vector<19x4xf32> to vector<1x1xf32>
    %119 = arith.negf %24 : vector<16x32xf32>
    %120 = math.exp %119 : vector<16x32xf32>
    %cst_27 = arith.constant 1.000000e+00 : f32
    %121 = vector.broadcast %cst_27 : f32 to vector<16x32xf32>
    %122 = arith.addf %121, %120 : vector<16x32xf32>
    %123 = arith.divf %121, %122 : vector<16x32xf32>
    %124 = vector.broadcast %118 : vector<1x1xf32> to vector<16x32xf32>
    %125 = arith.mulf %124, %123 : vector<16x32xf32>
    %126 = arith.addf %117, %125 : vector<16x32xf32>
    %127 = vector.extract_strided_slice %9 {offsets = [1, 0], sizes = [1, 1], strides = [1, 1]} : vector<19x4xf32> to vector<1x1xf32>
    %128 = vector.broadcast %127 : vector<1x1xf32> to vector<2x32xf32>
    %129 = arith.mulf %128, %57 : vector<2x32xf32>
    %130 = vector.extract_strided_slice %9 {offsets = [1, 1], sizes = [1, 1], strides = [1, 1]} : vector<19x4xf32> to vector<1x1xf32>
    %cst_28 = arith.constant 0.000000e+00 : f32
    %131 = vector.broadcast %cst_28 : f32 to vector<2x32xf32>
    %132 = arith.maximumf %57, %131 : vector<2x32xf32>
    %133 = vector.broadcast %130 : vector<1x1xf32> to vector<2x32xf32>
    %134 = arith.mulf %133, %132 : vector<2x32xf32>
    %135 = arith.addf %129, %134 : vector<2x32xf32>
    %136 = vector.extract_strided_slice %9 {offsets = [1, 2], sizes = [1, 1], strides = [1, 1]} : vector<19x4xf32> to vector<1x1xf32>
    %137 = math.tanh %57 : vector<2x32xf32>
    %138 = vector.broadcast %136 : vector<1x1xf32> to vector<2x32xf32>
    %139 = arith.mulf %138, %137 : vector<2x32xf32>
    %140 = arith.addf %135, %139 : vector<2x32xf32>
    %141 = vector.extract_strided_slice %9 {offsets = [1, 3], sizes = [1, 1], strides = [1, 1]} : vector<19x4xf32> to vector<1x1xf32>
    %142 = arith.negf %57 : vector<2x32xf32>
    %143 = math.exp %142 : vector<2x32xf32>
    %cst_29 = arith.constant 1.000000e+00 : f32
    %144 = vector.broadcast %cst_29 : f32 to vector<2x32xf32>
    %145 = arith.addf %144, %143 : vector<2x32xf32>
    %146 = arith.divf %144, %145 : vector<2x32xf32>
    %147 = vector.broadcast %141 : vector<1x1xf32> to vector<2x32xf32>
    %148 = arith.mulf %147, %146 : vector<2x32xf32>
    %149 = arith.addf %140, %148 : vector<2x32xf32>
    %150 = vector.extract_strided_slice %9 {offsets = [3, 0], sizes = [1, 1], strides = [1, 1]} : vector<19x4xf32> to vector<1x1xf32>
    %151 = vector.broadcast %150 : vector<1x1xf32> to vector<2x32xf32>
    %152 = arith.mulf %151, %80 : vector<2x32xf32>
    %153 = vector.extract_strided_slice %9 {offsets = [3, 1], sizes = [1, 1], strides = [1, 1]} : vector<19x4xf32> to vector<1x1xf32>
    %cst_30 = arith.constant 0.000000e+00 : f32
    %154 = vector.broadcast %cst_30 : f32 to vector<2x32xf32>
    %155 = arith.maximumf %80, %154 : vector<2x32xf32>
    %156 = vector.broadcast %153 : vector<1x1xf32> to vector<2x32xf32>
    %157 = arith.mulf %156, %155 : vector<2x32xf32>
    %158 = arith.addf %152, %157 : vector<2x32xf32>
    %159 = vector.extract_strided_slice %9 {offsets = [3, 2], sizes = [1, 1], strides = [1, 1]} : vector<19x4xf32> to vector<1x1xf32>
    %160 = math.tanh %80 : vector<2x32xf32>
    %161 = vector.broadcast %159 : vector<1x1xf32> to vector<2x32xf32>
    %162 = arith.mulf %161, %160 : vector<2x32xf32>
    %163 = arith.addf %158, %162 : vector<2x32xf32>
    %164 = vector.extract_strided_slice %9 {offsets = [3, 3], sizes = [1, 1], strides = [1, 1]} : vector<19x4xf32> to vector<1x1xf32>
    %165 = arith.negf %80 : vector<2x32xf32>
    %166 = math.exp %165 : vector<2x32xf32>
    %cst_31 = arith.constant 1.000000e+00 : f32
    %167 = vector.broadcast %cst_31 : f32 to vector<2x32xf32>
    %168 = arith.addf %167, %166 : vector<2x32xf32>
    %169 = arith.divf %167, %168 : vector<2x32xf32>
    %170 = vector.broadcast %164 : vector<1x1xf32> to vector<2x32xf32>
    %171 = arith.mulf %170, %169 : vector<2x32xf32>
    %172 = arith.addf %163, %171 : vector<2x32xf32>
    %173 = vector.extract_strided_slice %9 {offsets = [5, 0], sizes = [1, 1], strides = [1, 1]} : vector<19x4xf32> to vector<1x1xf32>
    %174 = vector.broadcast %173 : vector<1x1xf32> to vector<16x32xf32>
    %175 = arith.mulf %174, %103 : vector<16x32xf32>
    %176 = vector.extract_strided_slice %9 {offsets = [5, 1], sizes = [1, 1], strides = [1, 1]} : vector<19x4xf32> to vector<1x1xf32>
    %cst_32 = arith.constant 0.000000e+00 : f32
    %177 = vector.broadcast %cst_32 : f32 to vector<16x32xf32>
    %178 = arith.maximumf %103, %177 : vector<16x32xf32>
    %179 = vector.broadcast %176 : vector<1x1xf32> to vector<16x32xf32>
    %180 = arith.mulf %179, %178 : vector<16x32xf32>
    %181 = arith.addf %175, %180 : vector<16x32xf32>
    %182 = vector.extract_strided_slice %9 {offsets = [5, 2], sizes = [1, 1], strides = [1, 1]} : vector<19x4xf32> to vector<1x1xf32>
    %183 = math.tanh %103 : vector<16x32xf32>
    %184 = vector.broadcast %182 : vector<1x1xf32> to vector<16x32xf32>
    %185 = arith.mulf %184, %183 : vector<16x32xf32>
    %186 = arith.addf %181, %185 : vector<16x32xf32>
    %187 = vector.extract_strided_slice %9 {offsets = [5, 3], sizes = [1, 1], strides = [1, 1]} : vector<19x4xf32> to vector<1x1xf32>
    %188 = arith.negf %103 : vector<16x32xf32>
    %189 = math.exp %188 : vector<16x32xf32>
    %cst_33 = arith.constant 1.000000e+00 : f32
    %190 = vector.broadcast %cst_33 : f32 to vector<16x32xf32>
    %191 = arith.addf %190, %189 : vector<16x32xf32>
    %192 = arith.divf %190, %191 : vector<16x32xf32>
    %193 = vector.broadcast %187 : vector<1x1xf32> to vector<16x32xf32>
    %194 = arith.mulf %193, %192 : vector<16x32xf32>
    %195 = arith.addf %186, %194 : vector<16x32xf32>
    %196 = vector.extract_strided_slice %9 {offsets = [7, 0], sizes = [1, 1], strides = [1, 1]} : vector<19x4xf32> to vector<1x1xf32>
    %197 = vector.broadcast %196 : vector<1x1xf32> to vector<16x32xf32>
    %198 = arith.mulf %197, %126 : vector<16x32xf32>
    %199 = vector.extract_strided_slice %9 {offsets = [7, 1], sizes = [1, 1], strides = [1, 1]} : vector<19x4xf32> to vector<1x1xf32>
    %cst_34 = arith.constant 0.000000e+00 : f32
    %200 = vector.broadcast %cst_34 : f32 to vector<16x32xf32>
    %201 = arith.maximumf %126, %200 : vector<16x32xf32>
    %202 = vector.broadcast %199 : vector<1x1xf32> to vector<16x32xf32>
    %203 = arith.mulf %202, %201 : vector<16x32xf32>
    %204 = arith.addf %198, %203 : vector<16x32xf32>
    %205 = vector.extract_strided_slice %9 {offsets = [7, 2], sizes = [1, 1], strides = [1, 1]} : vector<19x4xf32> to vector<1x1xf32>
    %206 = math.tanh %126 : vector<16x32xf32>
    %207 = vector.broadcast %205 : vector<1x1xf32> to vector<16x32xf32>
    %208 = arith.mulf %207, %206 : vector<16x32xf32>
    %209 = arith.addf %204, %208 : vector<16x32xf32>
    %210 = vector.extract_strided_slice %9 {offsets = [7, 3], sizes = [1, 1], strides = [1, 1]} : vector<19x4xf32> to vector<1x1xf32>
    %211 = arith.negf %126 : vector<16x32xf32>
    %212 = math.exp %211 : vector<16x32xf32>
    %cst_35 = arith.constant 1.000000e+00 : f32
    %213 = vector.broadcast %cst_35 : f32 to vector<16x32xf32>
    %214 = arith.addf %213, %212 : vector<16x32xf32>
    %215 = arith.divf %213, %214 : vector<16x32xf32>
    %216 = vector.broadcast %210 : vector<1x1xf32> to vector<16x32xf32>
    %217 = arith.mulf %216, %215 : vector<16x32xf32>
    %218 = arith.addf %209, %217 : vector<16x32xf32>
    %219 = tpu.iota {dimensions = array<i32: 0>} : vector<2x16xi32>
    %220 = tpu.iota {dimensions = array<i32: 1>} : vector<2x16xi32>
    %c8_i32 = arith.constant 8 : i32
    %221 = vector.broadcast %c8_i32 : i32 to vector<2x16xi32>
    %222 = arith.muli %219, %221 : vector<2x16xi32>
    %223 = arith.cmpi sge, %220, %222 : vector<2x16xi32>
    %c8_i32_36 = arith.constant 8 : i32
    %224 = vector.broadcast %c8_i32_36 : i32 to vector<2x16xi32>
    %225 = arith.addi %222, %224 : vector<2x16xi32>
    %226 = arith.cmpi slt, %220, %225 : vector<2x16xi32>
    %227 = arith.andi %223, %226 : vector<2x16xi1>
    %228 = arith.extui %227 : vector<2x16xi1> to vector<2x16xi32>
    %229 = arith.sitofp %228 : vector<2x16xi32> to vector<2x16xf32>
    %cst_37 = arith.constant 1.250000e-01 : f32
    %230 = vector.broadcast %cst_37 : f32 to vector<2x16xf32>
    %231 = arith.mulf %229, %230 : vector<2x16xf32>
    %cst_38 = arith.constant dense<0.000000e+00> : vector<2x32xf32>
    %232 = tpu.matmul %231, %195, %cst_38 {dimension_numbers = #tpu.dot_dimension_numbers<[1], [0], [0], [1], [0, 0, 1, 1], [], []>} : vector<2x16xf32>, vector<16x32xf32>, vector<2x32xf32> -> vector<2x32xf32>
    %cst_39 = arith.constant dense<0.000000e+00> : vector<2x32xf32>
    %233 = tpu.matmul %231, %218, %cst_39 {dimension_numbers = #tpu.dot_dimension_numbers<[1], [0], [0], [1], [0, 0, 1, 1], [], []>} : vector<2x16xf32>, vector<16x32xf32>, vector<2x32xf32> -> vector<2x32xf32>
    %c0_40 = arith.constant 0 : index
    %c0_41 = arith.constant 0 : index
    %234 = vector.load %arg15[%c0_40, %c0_41] : memref<2x128xf32, #tpu.memory_space<vmem>>, vector<2x32xf32>
    tpu.vector_store %arg15[%c0_40, %c0_41], %149 {strides = array<i32>} : memref<2x128xf32, #tpu.memory_space<vmem>>, vector<2x32xf32>,
    %c0_42 = arith.constant 0 : index
    %c32 = arith.constant 32 : index
    %235 = vector.load %arg15[%c0_42, %c32] : memref<2x128xf32, #tpu.memory_space<vmem>>, vector<2x32xf32>
    tpu.vector_store %arg15[%c0_42, %c32], %232 {strides = array<i32>} : memref<2x128xf32, #tpu.memory_space<vmem>>, vector<2x32xf32>,
    %c0_43 = arith.constant 0 : index
    %c64 = arith.constant 64 : index
    %236 = vector.load %arg15[%c0_43, %c64] : memref<2x128xf32, #tpu.memory_space<vmem>>, vector<2x32xf32>
    tpu.vector_store %arg15[%c0_43, %c64], %233 {strides = array<i32>} : memref<2x128xf32, #tpu.memory_space<vmem>>, vector<2x32xf32>,
    %c0_44 = arith.constant 0 : index
    %c96 = arith.constant 96 : index
    %237 = vector.load %arg15[%c0_44, %c96] : memref<2x128xf32, #tpu.memory_space<vmem>>, vector<2x32xf32>
    tpu.vector_store %arg15[%c0_44, %c96], %172 {strides = array<i32>} : memref<2x128xf32, #tpu.memory_space<vmem>>, vector<2x32xf32>,
    %c0_45 = arith.constant 0 : index
    %c0_46 = arith.constant 0 : index
    %238 = vector.load %arg15[%c0_45, %c0_46] : memref<2x128xf32, #tpu.memory_space<vmem>>, vector<2x128xf32>
    %c0_47 = arith.constant 0 : index
    %c0_48 = arith.constant 0 : index
    %239 = vector.load %arg7[%c0_47, %c0_48] : memref<128x128xf32, #tpu.memory_space<vmem>>, vector<128x128xf32>
    %cst_49 = arith.constant dense<0.000000e+00> : vector<2x128xf32>
    %240 = tpu.matmul %238, %239, %cst_49 {dimension_numbers = #tpu.dot_dimension_numbers<[1], [0], [0], [1], [0, 0, 1, 1], [], []>} : vector<2x128xf32>, vector<128x128xf32>, vector<2x128xf32> -> vector<2x128xf32>
    %c0_50 = arith.constant 0 : index
    %c0_51 = arith.constant 0 : index
    %241 = vector.load %arg8[%c0_50, %c0_51] : memref<1x128xf32, #tpu.memory_space<vmem>>, vector<1x128xf32>
    %242 = vector.broadcast %241 : vector<1x128xf32> to vector<2x128xf32>
    %243 = arith.addf %240, %242 : vector<2x128xf32>
    %cst_52 = arith.constant 0.000000e+00 : f32
    %244 = vector.broadcast %cst_52 : f32 to vector<2x128xf32>
    %245 = arith.maximumf %243, %244 : vector<2x128xf32>
    %246 = vector.extract_strided_slice %245 {offsets = [0, 0], sizes = [2, 32], strides = [1, 1]} : vector<2x128xf32> to vector<2x32xf32>
    %247 = vector.extract_strided_slice %245 {offsets = [0, 32], sizes = [2, 32], strides = [1, 1]} : vector<2x128xf32> to vector<2x32xf32>
    %248 = vector.extract_strided_slice %245 {offsets = [0, 64], sizes = [2, 32], strides = [1, 1]} : vector<2x128xf32> to vector<2x32xf32>
    %249 = vector.extract_strided_slice %245 {offsets = [0, 96], sizes = [2, 32], strides = [1, 1]} : vector<2x128xf32> to vector<2x32xf32>
    %250 = vector.extract_strided_slice %9 {offsets = [8, 0], sizes = [1, 1], strides = [1, 1]} : vector<19x4xf32> to vector<1x1xf32>
    %251 = vector.broadcast %250 : vector<1x1xf32> to vector<2x32xf32>
    %252 = arith.mulf %251, %246 : vector<2x32xf32>
    %253 = vector.extract_strided_slice %9 {offsets = [8, 1], sizes = [1, 1], strides = [1, 1]} : vector<19x4xf32> to vector<1x1xf32>
    %cst_53 = arith.constant 0.000000e+00 : f32
    %254 = vector.broadcast %cst_53 : f32 to vector<2x32xf32>
    %255 = arith.maximumf %246, %254 : vector<2x32xf32>
    %256 = vector.broadcast %253 : vector<1x1xf32> to vector<2x32xf32>
    %257 = arith.mulf %256, %255 : vector<2x32xf32>
    %258 = arith.addf %252, %257 : vector<2x32xf32>
    %259 = vector.extract_strided_slice %9 {offsets = [8, 2], sizes = [1, 1], strides = [1, 1]} : vector<19x4xf32> to vector<1x1xf32>
    %260 = math.tanh %246 : vector<2x32xf32>
    %261 = vector.broadcast %259 : vector<1x1xf32> to vector<2x32xf32>
    %262 = arith.mulf %261, %260 : vector<2x32xf32>
    %263 = arith.addf %258, %262 : vector<2x32xf32>
    %264 = vector.extract_strided_slice %9 {offsets = [9, 0], sizes = [1, 1], strides = [1, 1]} : vector<19x4xf32> to vector<1x1xf32>
    %265 = vector.broadcast %264 : vector<1x1xf32> to vector<2x32xf32>
    %266 = arith.mulf %265, %247 : vector<2x32xf32>
    %267 = vector.extract_strided_slice %9 {offsets = [9, 1], sizes = [1, 1], strides = [1, 1]} : vector<19x4xf32> to vector<1x1xf32>
    %cst_54 = arith.constant 0.000000e+00 : f32
    %268 = vector.broadcast %cst_54 : f32 to vector<2x32xf32>
    %269 = arith.maximumf %247, %268 : vector<2x32xf32>
    %270 = vector.broadcast %267 : vector<1x1xf32> to vector<2x32xf32>
    %271 = arith.mulf %270, %269 : vector<2x32xf32>
    %272 = arith.addf %266, %271 : vector<2x32xf32>
    %273 = vector.extract_strided_slice %9 {offsets = [9, 2], sizes = [1, 1], strides = [1, 1]} : vector<19x4xf32> to vector<1x1xf32>
    %274 = math.tanh %247 : vector<2x32xf32>
    %275 = vector.broadcast %273 : vector<1x1xf32> to vector<2x32xf32>
    %276 = arith.mulf %275, %274 : vector<2x32xf32>
    %277 = arith.addf %272, %276 : vector<2x32xf32>
    %278 = arith.addf %263, %277 : vector<2x32xf32>
    %279 = vector.extract_strided_slice %9 {offsets = [10, 0], sizes = [1, 1], strides = [1, 1]} : vector<19x4xf32> to vector<1x1xf32>
    %280 = vector.broadcast %279 : vector<1x1xf32> to vector<2x32xf32>
    %281 = arith.mulf %280, %248 : vector<2x32xf32>
    %282 = vector.extract_strided_slice %9 {offsets = [10, 1], sizes = [1, 1], strides = [1, 1]} : vector<19x4xf32> to vector<1x1xf32>
    %cst_55 = arith.constant 0.000000e+00 : f32
    %283 = vector.broadcast %cst_55 : f32 to vector<2x32xf32>
    %284 = arith.maximumf %248, %283 : vector<2x32xf32>
    %285 = vector.broadcast %282 : vector<1x1xf32> to vector<2x32xf32>
    %286 = arith.mulf %285, %284 : vector<2x32xf32>
    %287 = arith.addf %281, %286 : vector<2x32xf32>
    %288 = vector.extract_strided_slice %9 {offsets = [10, 2], sizes = [1, 1], strides = [1, 1]} : vector<19x4xf32> to vector<1x1xf32>
    %289 = math.tanh %248 : vector<2x32xf32>
    %290 = vector.broadcast %288 : vector<1x1xf32> to vector<2x32xf32>
    %291 = arith.mulf %290, %289 : vector<2x32xf32>
    %292 = arith.addf %287, %291 : vector<2x32xf32>
    %293 = arith.addf %278, %292 : vector<2x32xf32>
    %294 = vector.extract_strided_slice %9 {offsets = [11, 0], sizes = [1, 1], strides = [1, 1]} : vector<19x4xf32> to vector<1x1xf32>
    %295 = vector.broadcast %294 : vector<1x1xf32> to vector<2x32xf32>
    %296 = arith.mulf %295, %249 : vector<2x32xf32>
    %297 = vector.extract_strided_slice %9 {offsets = [11, 1], sizes = [1, 1], strides = [1, 1]} : vector<19x4xf32> to vector<1x1xf32>
    %cst_56 = arith.constant 0.000000e+00 : f32
    %298 = vector.broadcast %cst_56 : f32 to vector<2x32xf32>
    %299 = arith.maximumf %249, %298 : vector<2x32xf32>
    %300 = vector.broadcast %297 : vector<1x1xf32> to vector<2x32xf32>
    %301 = arith.mulf %300, %299 : vector<2x32xf32>
    %302 = arith.addf %296, %301 : vector<2x32xf32>
    %303 = vector.extract_strided_slice %9 {offsets = [11, 2], sizes = [1, 1], strides = [1, 1]} : vector<19x4xf32> to vector<1x1xf32>
    %304 = math.tanh %249 : vector<2x32xf32>
    %305 = vector.broadcast %303 : vector<1x1xf32> to vector<2x32xf32>
    %306 = arith.mulf %305, %304 : vector<2x32xf32>
    %307 = arith.addf %302, %306 : vector<2x32xf32>
    %308 = arith.addf %293, %307 : vector<2x32xf32>
    %309 = vector.extract_strided_slice %9 {offsets = [17, 0], sizes = [1, 1], strides = [1, 1]} : vector<19x4xf32> to vector<1x1xf32>
    %cst_57 = arith.constant 0.000000e+00 : f32
    %310 = vector.broadcast %cst_57 : f32 to vector<2x32xf32>
    %311 = arith.maximumf %308, %310 : vector<2x32xf32>
    %312 = vector.broadcast %309 : vector<1x1xf32> to vector<2x32xf32>
    %313 = arith.mulf %312, %311 : vector<2x32xf32>
    %314 = vector.extract_strided_slice %9 {offsets = [17, 1], sizes = [1, 1], strides = [1, 1]} : vector<19x4xf32> to vector<1x1xf32>
    %315 = math.tanh %308 : vector<2x32xf32>
    %316 = vector.broadcast %314 : vector<1x1xf32> to vector<2x32xf32>
    %317 = arith.mulf %316, %315 : vector<2x32xf32>
    %318 = arith.addf %313, %317 : vector<2x32xf32>
    %319 = vector.extract_strided_slice %9 {offsets = [17, 2], sizes = [1, 1], strides = [1, 1]} : vector<19x4xf32> to vector<1x1xf32>
    %320 = arith.negf %308 : vector<2x32xf32>
    %321 = math.exp %320 : vector<2x32xf32>
    %cst_58 = arith.constant 1.000000e+00 : f32
    %322 = vector.broadcast %cst_58 : f32 to vector<2x32xf32>
    %323 = arith.addf %322, %321 : vector<2x32xf32>
    %324 = arith.divf %322, %323 : vector<2x32xf32>
    %325 = vector.broadcast %319 : vector<1x1xf32> to vector<2x32xf32>
    %326 = arith.mulf %325, %324 : vector<2x32xf32>
    %327 = arith.addf %318, %326 : vector<2x32xf32>
    %328 = vector.extract_strided_slice %9 {offsets = [17, 3], sizes = [1, 1], strides = [1, 1]} : vector<19x4xf32> to vector<1x1xf32>
    %329 = vector.broadcast %328 : vector<1x1xf32> to vector<2x32xf32>
    %330 = arith.mulf %329, %308 : vector<2x32xf32>
    %331 = arith.addf %327, %330 : vector<2x32xf32>
    %332 = vector.extract_strided_slice %9 {offsets = [12, 0], sizes = [1, 1], strides = [1, 1]} : vector<19x4xf32> to vector<1x1xf32>
    %333 = vector.broadcast %332 : vector<1x1xf32> to vector<2x32xf32>
    %334 = arith.mulf %333, %246 : vector<2x32xf32>
    %335 = vector.extract_strided_slice %9 {offsets = [12, 1], sizes = [1, 1], strides = [1, 1]} : vector<19x4xf32> to vector<1x1xf32>
    %cst_59 = arith.constant 0.000000e+00 : f32
    %336 = vector.broadcast %cst_59 : f32 to vector<2x32xf32>
    %337 = arith.maximumf %246, %336 : vector<2x32xf32>
    %338 = vector.broadcast %335 : vector<1x1xf32> to vector<2x32xf32>
    %339 = arith.mulf %338, %337 : vector<2x32xf32>
    %340 = arith.addf %334, %339 : vector<2x32xf32>
    %341 = vector.extract_strided_slice %9 {offsets = [12, 2], sizes = [1, 1], strides = [1, 1]} : vector<19x4xf32> to vector<1x1xf32>
    %342 = math.tanh %246 : vector<2x32xf32>
    %343 = vector.broadcast %341 : vector<1x1xf32> to vector<2x32xf32>
    %344 = arith.mulf %343, %342 : vector<2x32xf32>
    %345 = arith.addf %340, %344 : vector<2x32xf32>
    %346 = vector.extract_strided_slice %9 {offsets = [13, 0], sizes = [1, 1], strides = [1, 1]} : vector<19x4xf32> to vector<1x1xf32>
    %347 = vector.broadcast %346 : vector<1x1xf32> to vector<2x32xf32>
    %348 = arith.mulf %347, %247 : vector<2x32xf32>
    %349 = vector.extract_strided_slice %9 {offsets = [13, 1], sizes = [1, 1], strides = [1, 1]} : vector<19x4xf32> to vector<1x1xf32>
    %cst_60 = arith.constant 0.000000e+00 : f32
    %350 = vector.broadcast %cst_60 : f32 to vector<2x32xf32>
    %351 = arith.maximumf %247, %350 : vector<2x32xf32>
    %352 = vector.broadcast %349 : vector<1x1xf32> to vector<2x32xf32>
    %353 = arith.mulf %352, %351 : vector<2x32xf32>
    %354 = arith.addf %348, %353 : vector<2x32xf32>
    %355 = vector.extract_strided_slice %9 {offsets = [13, 2], sizes = [1, 1], strides = [1, 1]} : vector<19x4xf32> to vector<1x1xf32>
    %356 = math.tanh %247 : vector<2x32xf32>
    %357 = vector.broadcast %355 : vector<1x1xf32> to vector<2x32xf32>
    %358 = arith.mulf %357, %356 : vector<2x32xf32>
    %359 = arith.addf %354, %358 : vector<2x32xf32>
    %360 = arith.addf %345, %359 : vector<2x32xf32>
    %361 = vector.extract_strided_slice %9 {offsets = [14, 0], sizes = [1, 1], strides = [1, 1]} : vector<19x4xf32> to vector<1x1xf32>
    %362 = vector.broadcast %361 : vector<1x1xf32> to vector<2x32xf32>
    %363 = arith.mulf %362, %248 : vector<2x32xf32>
    %364 = vector.extract_strided_slice %9 {offsets = [14, 1], sizes = [1, 1], strides = [1, 1]} : vector<19x4xf32> to vector<1x1xf32>
    %cst_61 = arith.constant 0.000000e+00 : f32
    %365 = vector.broadcast %cst_61 : f32 to vector<2x32xf32>
    %366 = arith.maximumf %248, %365 : vector<2x32xf32>
    %367 = vector.broadcast %364 : vector<1x1xf32> to vector<2x32xf32>
    %368 = arith.mulf %367, %366 : vector<2x32xf32>
    %369 = arith.addf %363, %368 : vector<2x32xf32>
    %370 = vector.extract_strided_slice %9 {offsets = [14, 2], sizes = [1, 1], strides = [1, 1]} : vector<19x4xf32> to vector<1x1xf32>
    %371 = math.tanh %248 : vector<2x32xf32>
    %372 = vector.broadcast %370 : vector<1x1xf32> to vector<2x32xf32>
    %373 = arith.mulf %372, %371 : vector<2x32xf32>
    %374 = arith.addf %369, %373 : vector<2x32xf32>
    %375 = arith.addf %360, %374 : vector<2x32xf32>
    %376 = vector.extract_strided_slice %9 {offsets = [15, 0], sizes = [1, 1], strides = [1, 1]} : vector<19x4xf32> to vector<1x1xf32>
    %377 = vector.broadcast %376 : vector<1x1xf32> to vector<2x32xf32>
    %378 = arith.mulf %377, %249 : vector<2x32xf32>
    %379 = vector.extract_strided_slice %9 {offsets = [15, 1], sizes = [1, 1], strides = [1, 1]} : vector<19x4xf32> to vector<1x1xf32>
    %cst_62 = arith.constant 0.000000e+00 : f32
    %380 = vector.broadcast %cst_62 : f32 to vector<2x32xf32>
    %381 = arith.maximumf %249, %380 : vector<2x32xf32>
    %382 = vector.broadcast %379 : vector<1x1xf32> to vector<2x32xf32>
    %383 = arith.mulf %382, %381 : vector<2x32xf32>
    %384 = arith.addf %378, %383 : vector<2x32xf32>
    %385 = vector.extract_strided_slice %9 {offsets = [15, 2], sizes = [1, 1], strides = [1, 1]} : vector<19x4xf32> to vector<1x1xf32>
    %386 = math.tanh %249 : vector<2x32xf32>
    %387 = vector.broadcast %385 : vector<1x1xf32> to vector<2x32xf32>
    %388 = arith.mulf %387, %386 : vector<2x32xf32>
    %389 = arith.addf %384, %388 : vector<2x32xf32>
    %390 = arith.addf %375, %389 : vector<2x32xf32>
    %391 = vector.extract_strided_slice %9 {offsets = [16, 0], sizes = [1, 1], strides = [1, 1]} : vector<19x4xf32> to vector<1x1xf32>
    %392 = vector.broadcast %391 : vector<1x1xf32> to vector<2x32xf32>
    %393 = arith.mulf %392, %331 : vector<2x32xf32>
    %394 = vector.extract_strided_slice %9 {offsets = [16, 1], sizes = [1, 1], strides = [1, 1]} : vector<19x4xf32> to vector<1x1xf32>
    %cst_63 = arith.constant 0.000000e+00 : f32
    %395 = vector.broadcast %cst_63 : f32 to vector<2x32xf32>
    %396 = arith.maximumf %331, %395 : vector<2x32xf32>
    %397 = vector.broadcast %394 : vector<1x1xf32> to vector<2x32xf32>
    %398 = arith.mulf %397, %396 : vector<2x32xf32>
    %399 = arith.addf %393, %398 : vector<2x32xf32>
    %400 = vector.extract_strided_slice %9 {offsets = [16, 2], sizes = [1, 1], strides = [1, 1]} : vector<19x4xf32> to vector<1x1xf32>
    %401 = math.tanh %331 : vector<2x32xf32>
    %402 = vector.broadcast %400 : vector<1x1xf32> to vector<2x32xf32>
    %403 = arith.mulf %402, %401 : vector<2x32xf32>
    %404 = arith.addf %399, %403 : vector<2x32xf32>
    %405 = arith.addf %390, %404 : vector<2x32xf32>
    %406 = vector.extract_strided_slice %9 {offsets = [18, 0], sizes = [1, 1], strides = [1, 1]} : vector<19x4xf32> to vector<1x1xf32>
    %cst_64 = arith.constant 0.000000e+00 : f32
    %407 = vector.broadcast %cst_64 : f32 to vector<2x32xf32>
    %408 = arith.maximumf %405, %407 : vector<2x32xf32>
    %409 = vector.broadcast %406 : vector<1x1xf32> to vector<2x32xf32>
    %410 = arith.mulf %409, %408 : vector<2x32xf32>
    %411 = vector.extract_strided_slice %9 {offsets = [18, 1], sizes = [1, 1], strides = [1, 1]} : vector<19x4xf32> to vector<1x1xf32>
    %412 = math.tanh %405 : vector<2x32xf32>
    %413 = vector.broadcast %411 : vector<1x1xf32> to vector<2x32xf32>
    %414 = arith.mulf %413, %412 : vector<2x32xf32>
    %415 = arith.addf %410, %414 : vector<2x32xf32>
    %416 = vector.extract_strided_slice %9 {offsets = [18, 2], sizes = [1, 1], strides = [1, 1]} : vector<19x4xf32> to vector<1x1xf32>
    %417 = arith.negf %405 : vector<2x32xf32>
    %418 = math.exp %417 : vector<2x32xf32>
    %cst_65 = arith.constant 1.000000e+00 : f32
    %419 = vector.broadcast %cst_65 : f32 to vector<2x32xf32>
    %420 = arith.addf %419, %418 : vector<2x32xf32>
    %421 = arith.divf %419, %420 : vector<2x32xf32>
    %422 = vector.broadcast %416 : vector<1x1xf32> to vector<2x32xf32>
    %423 = arith.mulf %422, %421 : vector<2x32xf32>
    %424 = arith.addf %415, %423 : vector<2x32xf32>
    %425 = vector.extract_strided_slice %9 {offsets = [18, 3], sizes = [1, 1], strides = [1, 1]} : vector<19x4xf32> to vector<1x1xf32>
    %426 = vector.broadcast %425 : vector<1x1xf32> to vector<2x32xf32>
    %427 = arith.mulf %426, %405 : vector<2x32xf32>
    %428 = arith.addf %424, %427 : vector<2x32xf32>
    %c0_66 = arith.constant 0 : index
    %429 = memref.load %arg10[%c0_66] : memref<2xf32, #tpu.memory_space<smem>>
    %430 = vector.broadcast %429 : f32 to vector<2x32xf32>
    %431 = arith.mulf %331, %430 : vector<2x32xf32>
    %c1 = arith.constant 1 : index
    %432 = memref.load %arg10[%c1] : memref<2xf32, #tpu.memory_space<smem>>
    %433 = vector.broadcast %432 : f32 to vector<2x32xf32>
    %434 = arith.mulf %428, %433 : vector<2x32xf32>
    %435 = arith.addf %431, %434 : vector<2x32xf32>
    %c0_67 = arith.constant 0 : index
    %436 = memref.load %arg11[%c0_67] : memref<1xf32, #tpu.memory_space<smem>>
    %437 = vector.broadcast %436 : f32 to vector<2x32xf32>
    %438 = arith.addf %435, %437 : vector<2x32xf32>
    %c0_68 = arith.constant 0 : index
    %c0_69 = arith.constant 0 : index
    %439 = vector.load %arg12[%c0_68, %c0_69] : memref<32x4xf32, #tpu.memory_space<vmem>>, vector<32x4xf32>
    %cst_70 = arith.constant dense<0.000000e+00> : vector<2x4xf32>
    %440 = tpu.matmul %438, %439, %cst_70 {dimension_numbers = #tpu.dot_dimension_numbers<[1], [0], [0], [1], [0, 0, 1, 1], [], []>} : vector<2x32xf32>, vector<32x4xf32>, vector<2x4xf32> -> vector<2x4xf32>
    %c0_71 = arith.constant 0 : index
    %c0_72 = arith.constant 0 : index
    %441 = vector.load %arg13[%c0_71, %c0_72] : memref<1x4xf32, #tpu.memory_space<vmem>>, vector<1x4xf32>
    %442 = vector.broadcast %441 : vector<1x4xf32> to vector<2x4xf32>
    %443 = arith.addf %440, %442 : vector<2x4xf32>
    %cst_73 = arith.constant dense<0xFF800000> : vector<2xf32>
    %444 = vector.multi_reduction <maximumf>, %443, %cst_73 [1] : vector<2x4xf32> to vector<2xf32>
    %445 = vector.shape_cast %444 : vector<2xf32> to vector<2x1xf32>
    %446 = vector.broadcast %445 : vector<2x1xf32> to vector<2x4xf32>
    %447 = arith.subf %443, %446 : vector<2x4xf32>
    %448 = math.exp %447 : vector<2x4xf32>
    %cst_74 = arith.constant dense<0.000000e+00> : vector<2xf32>
    %449 = vector.multi_reduction <add>, %448, %cst_74 [1] : vector<2x4xf32> to vector<2xf32>
    %450 = vector.shape_cast %449 : vector<2xf32> to vector<2x1xf32>
    %451 = tpu.reciprocal %450 {approx = true} : vector<2x1xf32> -> vector<2x1xf32>
    %452 = vector.broadcast %451 : vector<2x1xf32> to vector<2x4xf32>
    %453 = arith.mulf %448, %452 : vector<2x4xf32>
    %c0_75 = arith.constant 0 : index
    %c0_76 = arith.constant 0 : index
    %454 = vector.load %arg14[%c0_75, %c0_76] : memref<2x4xf32, #tpu.memory_space<vmem>>, vector<2x4xf32>
    tpu.vector_store %arg14[%c0_75, %c0_76], %453 {strides = array<i32>} : memref<2x4xf32, #tpu.memory_space<vmem>>, vector<2x4xf32>,
    return
  }
}

</mosaic_0001>

<llo_original>
// kernel: network_prune_forward.1
$region0: #{network_prune_forward.1}
  #allocation0 [shape = 'u32[]', space=smem, size = 0x4, offset = 0x4, fixed_abs, tag = 'smem constant byte address 0x4 - core index']
  #allocation1 [shape = 'u32[144,128]{1,0:T(1,128)}', space=vmem, size = 0x12000, scoped, tag = 'internal scratch']
  #allocation2 [shape = 'f32[2,128]{1,0:T(2,128)}', space=vmem, size = 0x400, scoped, tag = 'scratch operand']
  #allocation3 [shape = 'f32[1]{0:T(128)S(6)}', space=smem, size = 0x200, scoped, tag = 'scoped memory for network_prune_forward.1']
  %s0 = inlined_call_operand.vmem [shape: s32[16,1], index: 0, kind: input, shape index: {}]
  %s1 = inlined_call_operand.vmem [shape: s32[16,1], index: 1, kind: input, shape index: {}]
  %s2 = inlined_call_operand.vmem [shape: f32[2,32], index: 2, kind: input, shape index: {}]
  %s3 = inlined_call_operand.vmem [shape: f32[64,32], index: 3, kind: input, shape index: {}]
  %s4 = inlined_call_operand.vmem [shape: f32[64,32], index: 4, kind: input, shape index: {}]
  %s5 = inlined_call_operand.vmem [shape: f32[32,64], index: 5, kind: input, shape index: {}]
  %s6 = inlined_call_operand.vmem [shape: f32[1,64], index: 6, kind: input, shape index: {}]
  %s7 = inlined_call_operand.vmem [shape: f32[128,128], index: 7, kind: input, shape index: {}]
  %s8 = inlined_call_operand.vmem [shape: f32[1,128], index: 8, kind: input, shape index: {}]
  %s9 = inlined_call_operand.vmem [shape: f32[19,4], index: 9, kind: input, shape index: {}]
  %s10 = inlined_call_operand.vmem [shape: f32[2], index: 10, kind: input, shape index: {}]
  %s11 = inlined_call_operand.<no memory space> [shape: f32[1], index: 11, kind: input, shape index: {}]
  %s12 = inlined_call_operand.vmem [shape: f32[32,4], index: 12, kind: input, shape index: {}]
  %s13 = inlined_call_operand.vmem [shape: f32[1,4], index: 13, kind: input, shape index: {}]
  %s14 = inlined_call_operand.hbm [shape: f32[2,4], index: 14, kind: output, shape index: {}]
  %s15 = sld [smem:[#allocation0]]
  $region70: #{network_prune_forward.1} parent=0
    _
  %s17 = ssub.s32 1, %s15
  %s18 = scalar_select 0, %s17, %s15
  %19 = sst [smem:[#allocation3]] %s11
  $region1: #{network_prune_forward.1} parent=0
    #allocation4 [shape = 'u8[512]{0}', space=smem, size = 0x200, scoped, tag = 'input window, operand 10, single buffered']
    #allocation5 [shape = 's32[1]{0}', space=sflag, size = 0x4, scoped, tag = 'scoped memory for network_prune_forward.1']
    #allocation6 [shape = 's32[1]{0}', space=sflag, size = 0x4, scoped, tag = 'scoped memory for network_prune_forward.1']
    #allocation7 [shape = 'u8[1024]{0}', space=vmem, size = 0x400, scoped, tag = 'output window, operand 0, single buffered']
    %20 = vsyncpa [#allocation6], 0
    %21 = vsyncpa [#allocation5], 0
    // Predicated region
    $region2: #{network_prune_forward.1} parent=1 // pred_check
      _
    $region3: #{network_prune_forward.1} parent=1 // pred_check_branch
      %23 = sbr.rel (0) target = $region5
    $region4: #{network_prune_forward.1} parent=1 // pred_region
      _
    $region5: #{network_prune_forward.1} parent=1 // pred_fallthru
      _
    // Predicated region
    $region6: #{network_prune_forward.1} parent=1 // pred_check
      _
    $region7: #{network_prune_forward.1} parent=1 // pred_check_branch
      %25 = sbr.rel (0) target = $region9
    $region8: #{network_prune_forward.1} parent=1 // pred_region
      _
    $region9: #{network_prune_forward.1} parent=1 // pred_fallthru
      _
    // Predicated region
    $region10: #{network_prune_forward.1} parent=1 // pred_check
      _
    $region11: #{network_prune_forward.1} parent=1 // pred_check_branch
      %27 = sbr.rel (0) target = $region13
    $region12: #{network_prune_forward.1} parent=1 // pred_region
      _
    $region13: #{network_prune_forward.1} parent=1 // pred_fallthru
      _
    // Predicated region
    $region14: #{network_prune_forward.1} parent=1 // pred_check
      _
    $region15: #{network_prune_forward.1} parent=1 // pred_check_branch
      %29 = sbr.rel (0) target = $region17
    $region16: #{network_prune_forward.1} parent=1 // pred_region
      _
    $region17: #{network_prune_forward.1} parent=1 // pred_fallthru
      _
    // Predicated region
    $region18: #{network_prune_forward.1} parent=1 // pred_check
      _
    $region19: #{network_prune_forward.1} parent=1 // pred_check_branch
      %31 = sbr.rel (0) target = $region21
    $region20: #{network_prune_forward.1} parent=1 // pred_region
      _
    $region21: #{network_prune_forward.1} parent=1 // pred_fallthru
      _
    // Predicated region
    $region22: #{network_prune_forward.1} parent=1 // pred_check
      _
    $region23: #{network_prune_forward.1} parent=1 // pred_check_branch
      %33 = sbr.rel (0) target = $region25
    $region24: #{network_prune_forward.1} parent=1 // pred_region
      _
    $region25: #{network_prune_forward.1} parent=1 // pred_fallthru
      _
    // Predicated region
    $region26: #{network_prune_forward.1} parent=1 // pred_check
      _
    $region27: #{network_prune_forward.1} parent=1 // pred_check_branch
      %35 = sbr.rel (0) target = $region29
    $region28: #{network_prune_forward.1} parent=1 // pred_region
      _
    $region29: #{network_prune_forward.1} parent=1 // pred_fallthru
      _
    // Predicated region
    $region30: #{network_prune_forward.1} parent=1 // pred_check
      _
    $region31: #{network_prune_forward.1} parent=1 // pred_check_branch
      %37 = sbr.rel (0) target = $region33
    $region32: #{network_prune_forward.1} parent=1 // pred_region
      _
    $region33: #{network_prune_forward.1} parent=1 // pred_fallthru
      _
    // Predicated region
    $region34: #{network_prune_forward.1} parent=1 // pred_check
      _
    $region35: #{network_prune_forward.1} parent=1 // pred_check_branch
      %39 = sbr.rel (0) target = $region37
    $region36: #{network_prune_forward.1} parent=1 // pred_region
      _
    $region37: #{network_prune_forward.1} parent=1 // pred_fallthru
      _
    // Predicated region
    $region38: #{network_prune_forward.1} parent=1 // pred_check
      _
    $region39: #{network_prune_forward.1} parent=1 // pred_check_branch
      %41 = sbr.rel (0) target = $region41
    $region40: #{network_prune_forward.1} parent=1 // pred_region
      _
    $region41: #{network_prune_forward.1} parent=1 // pred_fallthru
      _
    // Predicated region
    $region42: #{network_prune_forward.1} parent=1 // pred_check
      _
    $region43: #{network_prune_forward.1} parent=1 // pred_check_branch
      %43 = sbr.rel (0) target = $region45
    $region44: #{network_prune_forward.1} parent=1 // pred_region
      %s45 = ssub.s32 16, 16
      %46 = vsyncadd [#allocation6], %s45
      %s48 = sshll.u32 %s10, 4
      %s49 = int_to_ptr.vmem [resolvable:$true] %s48
      %51 = dma.vmem_to_smem %s49, 16, [#allocation4], [#allocation6]
    $region45: #{network_prune_forward.1} parent=1 // pred_fallthru
      _
    // Predicated region
    $region46: #{network_prune_forward.1} parent=1 // pred_check
      _
    $region47: #{network_prune_forward.1} parent=1 // pred_check_branch
      %53 = sbr.rel (0) target = $region49
    $region48: #{network_prune_forward.1} parent=1 // pred_region
      _
    $region49: #{network_prune_forward.1} parent=1 // pred_fallthru
      _
    // Predicated region
    $region50: #{network_prune_forward.1} parent=1 // pred_check
      _
    $region51: #{network_prune_forward.1} parent=1 // pred_check_branch
      %55 = sbr.rel (0) target = $region53
    $region52: #{network_prune_forward.1} parent=1 // pred_region
      _
    $region53: #{network_prune_forward.1} parent=1 // pred_fallthru
      _
    // Predicated region
    $region54: #{network_prune_forward.1} parent=1 // pred_check
      _
    $region55: #{network_prune_forward.1} parent=1 // pred_check_branch
      %57 = sbr.rel (0) target = $region57
    $region56: #{network_prune_forward.1} parent=1 // pred_region
      _
    $region57: #{network_prune_forward.1} parent=1 // pred_fallthru
      _
    // Predicated region
    $region58: #{network_prune_forward.1} parent=1 // pred_check
      _
    $region59: #{network_prune_forward.1} parent=1 // pred_check_branch
      %59 = sbr.rel (0) target = $region61
    $region60: #{network_prune_forward.1} parent=1 // pred_region
      %60 = dma.done [#allocation6], 16
    $region61: #{network_prune_forward.1} parent=1 // pred_fallthru
      _
    %61 = sfence
    %v62 = vld [vmem:[%s9] sm:$0xff]
    %v63 = vld [vmem:[%s9 + $0x8] sm:$0xff]
    %v64 = vld [vmem:[%s9 + $0x10] sm:$0x7]
    %vm65 = vcmask 31744
    %v66 = vsel %vm65, %v62, -inf
    %67 = vmax.xlane.f32.xlu0 %v66
    %v68 = vpop.xlane.xlu0 %67
    %v69 = vsel %vm65, %v63, -inf
    %70 = vmax.xlane.f32.xlu0 %v69
    %v71 = vpop.xlane.xlu0 %70
    %vm72 = vcmask 26624
    %v73 = vsel %vm72, %v64, -inf
    %74 = vmax.xlane.f32.xlu0 %v73
    %v75 = vpop.xlane.xlu0 %74
    %v76 = vsub.f32 %v62, %v68
    %v77 = vsub.f32 %v63, %v71
    %v78 = vsub.f32 %v64, %v75
    %v79 = vmul.f32 %v76, 1.442695
    %v80 = vpow.pop %v79
    %v81 = vmul.f32 %v77, 1.442695
    %v82 = vpow.pop %v81
    %v83 = vmul.f32 %v78, 1.442695
    %v84 = vpow.pop %v83
    %v85 = vsel %vm65, %v80, 0.0
    %86 = vadd.xlane.f32.xlu0 %v85
    %v87 = vpop.xlane.xlu0 %86
    %v88 = vsel %vm65, %v82, 0.0
    %89 = vadd.xlane.f32.xlu0 %v88
    %v90 = vpop.xlane.xlu0 %89
    %v91 = vsel %vm72, %v84, 0.0
    %92 = vadd.xlane.f32.xlu0 %v91
    %v93 = vpop.xlane.xlu0 %92
    %v94 = vrcp.pop %v87
    %v95 = vmul.f32 %v80, %v94
    %v96 = vrcp.pop %v90
    %v97 = vmul.f32 %v82, %v96
    %v98 = vrcp.pop %v93
    %v99 = vmul.f32 %v84, %v98
    %v100 = vlaneseq
    %v101 = vand.u32 %v100, 127
    %v102 = vld [vmem:[%s0] sm:$0xff]
    %v103 = vld [vmem:[%s0 + $0x8] sm:$0xff]
    %104 = vset.pattern.permute.xlu0 0
    %105 = vperm.xlu0 %104, %v102
    %v106 = vpop.permute.xlu0 %105
    %107 = vset.pattern.permute.xlu0 0
    %108 = vperm.xlu0 %107, %v103
    %v109 = vpop.permute.xlu0 %108
    %vm110 = vcmp.eq.s32.totalorder %v101, %v106
    %vm111 = vcmp.eq.s32.totalorder %v101, %v109
    %v112 = vsel %vm110, 1, 0
    %v113 = vsel %vm111, 1, 0
    %v114 = vcvt.s32.f32 %v112
    %v115 = vcvt.s32.f32 %v113
    %v116 = vld [vmem:[%s1] sm:$0xff]
    %v117 = vld [vmem:[%s1 + $0x8] sm:$0xff]
    %118 = vset.pattern.permute.xlu0 0
    %119 = vperm.xlu0 %118, %v116
    %v120 = vpop.permute.xlu0 %119
    %121 = vset.pattern.permute.xlu0 0
    %122 = vperm.xlu0 %121, %v117
    %v123 = vpop.permute.xlu0 %122
    %vm124 = vcmp.eq.s32.totalorder %v101, %v120
    %vm125 = vcmp.eq.s32.totalorder %v101, %v123
    %v126 = vsel %vm124, 1, 0
    %v127 = vsel %vm125, 1, 0
    %v128 = vcvt.s32.f32 %v126
    %v129 = vcvt.s32.f32 %v127
    %v130 = vld [vmem:[%s3] sm:$0xff]
    %v131 = vld [vmem:[%s3 + $0x8] sm:$0xff]
    %v132 = vld [vmem:[%s3 + $0x10] sm:$0xff]
    %v133 = vld [vmem:[%s3 + $0x18] sm:$0xff]
    %v134 = vld [vmem:[%s3 + $0x20] sm:$0xff]
    %v135 = vld [vmem:[%s3 + $0x28] sm:$0xff]
    %v136 = vld [vmem:[%s3 + $0x30] sm:$0xff]
    %v137 = vld [vmem:[%s3 + $0x38] sm:$0xff]
    %vm138 = vcmask 523264
    %v140 = vsel %vm138, %v114, 0
    %v143 = vsel %vm138, %v115, 0
    %145 = vmatprep.subr.mxu0 0.0
    %146 = vmatpush1.msra.mxu0 %v130
    %147 = vmatprep.subr.mxu0 0.0
    %148 = vmatpush1.msra.mxu0 %v131
    %149 = vmatprep.subr.mxu0 0.0
    %150 = vmatpush1.msra.mxu0 %v132
    %151 = vmatprep.subr.mxu0 0.0
    %152 = vmatpush1.msra.mxu0 %v133
    %153 = vmatprep.subr.mxu0 0.0
    %154 = vmatpush1.msra.mxu0 %v134
    %155 = vmatprep.subr.mxu0 0.0
    %156 = vmatpush1.msra.mxu0 %v135
    %157 = vmatprep.subr.mxu0 0.0
    %158 = vmatpush1.msra.mxu0 %v136
    %159 = vmatprep.subr.mxu0 0.0
    %160 = vmatpush1.msra.mxu0 %v137
    %161 = vmatprep.subr.mxu0 0.0
    %162 = vmatpush1.msra.mxu0 0.0
    %163 = vmatprep.subr.mxu0 0.0
    %164 = vmatpush1.msra.mxu0 0.0
    %165 = vmatprep.subr.mxu0 0.0
    %166 = vmatpush1.msra.mxu0 0.0
    %167 = vmatprep.subr.mxu0 0.0
    %168 = vmatpush1.msra.mxu0 0.0
    %169 = vmatprep.subr.mxu0 0.0
    %170 = vmatpush1.msra.mxu0 0.0
    %171 = vmatprep.subr.mxu0 0.0
    %172 = vmatpush1.msra.mxu0 0.0
    %173 = vmatprep.subr.mxu0 0.0
    %174 = vmatpush1.msra.mxu0 0.0
    %175 = vmatprep.subr.mxu0 0.0
    %176 = vmatpush1.msra.mxu0 0.0
    %177 = vmatprep.subr.mxu0 0.0
    %178 = vmatpush1.msra.mxu0 0.0
    %179 = vmatprep.subr.mxu0 0.0
    %180 = vmatpush1.msra.mxu0 0.0
    %181 = vmatprep.subr.mxu0 0.0
    %182 = vmatpush1.msra.mxu0 0.0
    %183 = vmatprep.subr.mxu0 0.0
    %184 = vmatpush1.msra.mxu0 0.0
    %185 = vmatprep.subr.mxu0 0.0
    %186 = vmatpush1.msra.mxu0 0.0
    %187 = vmatprep.subr.mxu0 0.0
    %188 = vmatpush1.msra.mxu0 0.0
    %189 = vmatprep.subr.mxu0 0.0
    %190 = vmatpush1.msra.mxu0 0.0
    %191 = vmatprep.subr.mxu0 0.0
    %192 = vmatpush1.msra.mxu0 0.0
    %193 = vmatprep.subr.mxu0 0.0
    %194 = vmatpush1.msra.mxu0 0.0
    %195 = vmatprep.subr.mxu0 0.0
    %196 = vmatpush1.msra.mxu0 0.0
    %197 = vmatprep.subr.mxu0 0.0
    %198 = vmatpush1.msra.mxu0 0.0
    %199 = vmatprep.subr.mxu0 0.0
    %200 = vmatpush1.msra.mxu0 0.0
    %201 = vmatprep.subr.mxu0 0.0
    %202 = vmatpush1.msra.mxu0 0.0
    %203 = vmatprep.subr.mxu0 0.0
    %204 = vmatpush1.msra.mxu0 0.0
    %205 = vmatprep.subr.mxu0 0.0
    %206 = vmatpush1.msra.mxu0 0.0
    %207 = vmatprep.subr.mxu0 0.0
    %208 = vmatpush1.msra.mxu0 0.0
    %209 = vmatprep.mubr.f32.mxu0 0.0
    %210 = vmatmul.mubr.f32.gmra.mrb[0].mxu0 %v140
    %v211 = vpop.f32.mrb[0].mxu0
    %v212 = vadd.f32 0.0, %v211
    %v213 = vpop.f32.mrb[0].mxu0
    %214 = vmatprep.mubr.f32.mxu0 0.0
    %215 = vmatmul.mubr.f32.gmra.mrb[0].mxu0 %v143
    %v216 = vpop.f32.mrb[0].mxu0
    %v217 = vadd.f32 0.0, %v216
    %v218 = vpop.f32.mrb[0].mxu0
    %219 = vdwg.mxu0
    %v220 = vld [vmem:[%s4] sm:$0xff]
    %v221 = vld [vmem:[%s4 + $0x8] sm:$0xff]
    %v222 = vld [vmem:[%s4 + $0x10] sm:$0xff]
    %v223 = vld [vmem:[%s4 + $0x18] sm:$0xff]
    %v224 = vld [vmem:[%s4 + $0x20] sm:$0xff]
    %v225 = vld [vmem:[%s4 + $0x28] sm:$0xff]
    %v226 = vld [vmem:[%s4 + $0x30] sm:$0xff]
    %v227 = vld [vmem:[%s4 + $0x38] sm:$0xff]
    %v229 = vsel %vm138, %v128, 0
    %v232 = vsel %vm138, %v129, 0
    %234 = vmatprep.subr.mxu0 0.0
    %235 = vmatpush1.msra.mxu0 %v220
    %236 = vmatprep.subr.mxu0 0.0
    %237 = vmatpush1.msra.mxu0 %v221
    %238 = vmatprep.subr.mxu0 0.0
    %239 = vmatpush1.msra.mxu0 %v222
    %240 = vmatprep.subr.mxu0 0.0
    %241 = vmatpush1.msra.mxu0 %v223
    %242 = vmatprep.subr.mxu0 0.0
    %243 = vmatpush1.msra.mxu0 %v224
    %244 = vmatprep.subr.mxu0 0.0
    %245 = vmatpush1.msra.mxu0 %v225
    %246 = vmatprep.subr.mxu0 0.0
    %247 = vmatpush1.msra.mxu0 %v226
    %248 = vmatprep.subr.mxu0 0.0
    %249 = vmatpush1.msra.mxu0 %v227
    %250 = vmatprep.subr.mxu0 0.0
    %251 = vmatpush1.msra.mxu0 0.0
    %252 = vmatprep.subr.mxu0 0.0
    %253 = vmatpush1.msra.mxu0 0.0
    %254 = vmatprep.subr.mxu0 0.0
    %255 = vmatpush1.msra.mxu0 0.0
    %256 = vmatprep.subr.mxu0 0.0
    %257 = vmatpush1.msra.mxu0 0.0
    %258 = vmatprep.subr.mxu0 0.0
    %259 = vmatpush1.msra.mxu0 0.0
    %260 = vmatprep.subr.mxu0 0.0
    %261 = vmatpush1.msra.mxu0 0.0
    %262 = vmatprep.subr.mxu0 0.0
    %263 = vmatpush1.msra.mxu0 0.0
    %264 = vmatprep.subr.mxu0 0.0
    %265 = vmatpush1.msra.mxu0 0.0
    %266 = vmatprep.subr.mxu0 0.0
    %267 = vmatpush1.msra.mxu0 0.0
    %268 = vmatprep.subr.mxu0 0.0
    %269 = vmatpush1.msra.mxu0 0.0
    %270 = vmatprep.subr.mxu0 0.0
    %271 = vmatpush1.msra.mxu0 0.0
    %272 = vmatprep.subr.mxu0 0.0
    %273 = vmatpush1.msra.mxu0 0.0
    %274 = vmatprep.subr.mxu0 0.0
    %275 = vmatpush1.msra.mxu0 0.0
    %276 = vmatprep.subr.mxu0 0.0
    %277 = vmatpush1.msra.mxu0 0.0
    %278 = vmatprep.subr.mxu0 0.0
    %279 = vmatpush1.msra.mxu0 0.0
    %280 = vmatprep.subr.mxu0 0.0
    %281 = vmatpush1.msra.mxu0 0.0
    %282 = vmatprep.subr.mxu0 0.0
    %283 = vmatpush1.msra.mxu0 0.0
    %284 = vmatprep.subr.mxu0 0.0
    %285 = vmatpush1.msra.mxu0 0.0
    %286 = vmatprep.subr.mxu0 0.0
    %287 = vmatpush1.msra.mxu0 0.0
    %288 = vmatprep.subr.mxu0 0.0
    %289 = vmatpush1.msra.mxu0 0.0
    %290 = vmatprep.subr.mxu0 0.0
    %291 = vmatpush1.msra.mxu0 0.0
    %292 = vmatprep.subr.mxu0 0.0
    %293 = vmatpush1.msra.mxu0 0.0
    %294 = vmatprep.subr.mxu0 0.0
    %295 = vmatpush1.msra.mxu0 0.0
    %296 = vmatprep.subr.mxu0 0.0
    %297 = vmatpush1.msra.mxu0 0.0
    %298 = vmatprep.mubr.f32.mxu0 0.0
    %299 = vmatmul.mubr.f32.gmra.mrb[0].mxu0 %v229
    %v300 = vpop.f32.mrb[0].mxu0
    %v301 = vadd.f32 0.0, %v300
    %v302 = vpop.f32.mrb[0].mxu0
    %303 = vmatprep.mubr.f32.mxu0 0.0
    %304 = vmatmul.mubr.f32.gmra.mrb[0].mxu0 %v232
    %v305 = vpop.f32.mrb[0].mxu0
    %v306 = vadd.f32 0.0, %v305
    %v307 = vpop.f32.mrb[0].mxu0
    %308 = vdwg.mxu0
    %v309 = vld [vmem:[%s2] sm:$0x3]
    %v310 = vld [vmem:[%s5] sm:$0xff]
    %v311 = vld [vmem:[%s5 + $0x8] sm:$0xff]
    %v312 = vld [vmem:[%s5 + $0x10] sm:$0xff]
    %v313 = vld [vmem:[%s5 + $0x18] sm:$0xff]
    %v314 = vld [vmem:[%s6] sm:$0x1]
    %v316 = vlaneseq
    %v317 = vshrl.u32 %v316, 7
    %v318 = vsub.s32 0, %v317
    %v319 = vrot.slane %v314, %v318
    %vm321 = vcmask 261120
    %v323 = vsel %vm321, %v309, 0
    %325 = vmatprep.subr.mxu0 0.0
    %326 = vmatpush1.msra.mxu0 %v310
    %327 = vmatprep.subr.mxu0 0.0
    %328 = vmatpush1.msra.mxu0 %v311
    %329 = vmatprep.subr.mxu0 0.0
    %330 = vmatpush1.msra.mxu0 %v312
    %331 = vmatprep.subr.mxu0 0.0
    %332 = vmatpush1.msra.mxu0 %v313
    %333 = vmatprep.subr.mxu0 0.0
    %334 = vmatpush1.msra.mxu0 0.0
    %335 = vmatprep.subr.mxu0 0.0
    %336 = vmatpush1.msra.mxu0 0.0
    %337 = vmatprep.subr.mxu0 0.0
    %338 = vmatpush1.msra.mxu0 0.0
    %339 = vmatprep.subr.mxu0 0.0
    %340 = vmatpush1.msra.mxu0 0.0
    %341 = vmatprep.subr.mxu0 0.0
    %342 = vmatpush1.msra.mxu0 0.0
    %343 = vmatprep.subr.mxu0 0.0
    %344 = vmatpush1.msra.mxu0 0.0
    %345 = vmatprep.subr.mxu0 0.0
    %346 = vmatpush1.msra.mxu0 0.0
    %347 = vmatprep.subr.mxu0 0.0
    %348 = vmatpush1.msra.mxu0 0.0
    %349 = vmatprep.subr.mxu0 0.0
    %350 = vmatpush1.msra.mxu0 0.0
    %351 = vmatprep.subr.mxu0 0.0
    %352 = vmatpush1.msra.mxu0 0.0
    %353 = vmatprep.subr.mxu0 0.0
    %354 = vmatpush1.msra.mxu0 0.0
    %355 = vmatprep.subr.mxu0 0.0
    %356 = vmatpush1.msra.mxu0 0.0
    %357 = vmatprep.subr.mxu0 0.0
    %358 = vmatpush1.msra.mxu0 0.0
    %359 = vmatprep.subr.mxu0 0.0
    %360 = vmatpush1.msra.mxu0 0.0
    %361 = vmatprep.subr.mxu0 0.0
    %362 = vmatpush1.msra.mxu0 0.0
    %363 = vmatprep.subr.mxu0 0.0
    %364 = vmatpush1.msra.mxu0 0.0
    %365 = vmatprep.subr.mxu0 0.0
    %366 = vmatpush1.msra.mxu0 0.0
    %367 = vmatprep.subr.mxu0 0.0
    %368 = vmatpush1.msra.mxu0 0.0
    %369 = vmatprep.subr.mxu0 0.0
    %370 = vmatpush1.msra.mxu0 0.0
    %371 = vmatprep.subr.mxu0 0.0
    %372 = vmatpush1.msra.mxu0 0.0
    %373 = vmatprep.subr.mxu0 0.0
    %374 = vmatpush1.msra.mxu0 0.0
    %375 = vmatprep.subr.mxu0 0.0
    %376 = vmatpush1.msra.mxu0 0.0
    %377 = vmatprep.subr.mxu0 0.0
    %378 = vmatpush1.msra.mxu0 0.0
    %379 = vmatprep.subr.mxu0 0.0
    %380 = vmatpush1.msra.mxu0 0.0
    %381 = vmatprep.subr.mxu0 0.0
    %382 = vmatpush1.msra.mxu0 0.0
    %383 = vmatprep.subr.mxu0 0.0
    %384 = vmatpush1.msra.mxu0 0.0
    %385 = vmatprep.subr.mxu0 0.0
    %386 = vmatpush1.msra.mxu0 0.0
    %387 = vmatprep.subr.mxu0 0.0
    %388 = vmatpush1.msra.mxu0 0.0
    %389 = vmatprep.mubr.f32.mxu0 0.0
    %390 = vmatmul.mubr.f32.gmra.mrb[0].mxu0 %v323
    %v391 = vpop.f32.mrb[0].mxu0
    %v392 = vadd.f32 %v319, %v391
    %v393 = vpop.f32.mrb[0].mxu0
    %394 = vdwg.mxu0
    %v395 = vmax.f32 %v392, 0.0
    %s397 = vtos %v95
    %v398 = vstv %s397
    %v400 = vmul.f32 %v398, %v395
    %v401 = vmax.f32 %v395, 0.0
    %402 = vrot.lane.b32.xlu0 %v95, 127
    %v403 = vpop.permute.xlu0 %402
    %s404 = vtos %v403
    %v405 = vstv %s404
    %v407 = vmul.f32 %v405, %v401
    %v408 = vadd.f32 %v400, %v407
    %v409 = vtanh.pop %v395
    %410 = vrot.lane.b32.xlu0 %v95, 126
    %v411 = vpop.permute.xlu0 %410
    %s412 = vtos %v411
    %v413 = vstv %s412
    %v415 = vmul.f32 %v413, %v409
    %v416 = vadd.f32 %v408, %v415
    %v417 = vxor.u32 %v395, 2147483648
    %v418 = vmul.f32 %v417, 1.442695
    %v419 = vpow.pop %v418
    %v420 = vadd.f32 %v419, 1.0
    %v421 = vrcp.pop %v420
    %v422 = vmul.f32 1.0, %v421
    %423 = vrot.lane.b32.xlu0 %v95, 125
    %v424 = vpop.permute.xlu0 %423
    %s425 = vtos %v424
    %v426 = vstv %s425
    %v428 = vmul.f32 %v426, %v422
    %v429 = vadd.f32 %v416, %v428
    %v430 = vrot.slane %v95, 2
    %s431 = vtos %v430
    %v432 = vstv %s431
    %v434 = vmul.f32 %v432, %v395
    %435 = vrot.lane.b32.xlu0 %v430, 127
    %v436 = vpop.permute.xlu0 %435
    %s437 = vtos %v436
    %v438 = vstv %s437
    %v440 = vmul.f32 %v438, %v401
    %v441 = vadd.f32 %v434, %v440
    %442 = vrot.lane.b32.xlu0 %v430, 126
    %v443 = vpop.permute.xlu0 %442
    %s444 = vtos %v443
    %v445 = vstv %s444
    %v447 = vmul.f32 %v445, %v409
    %v448 = vadd.f32 %v441, %v447
    %449 = vrot.lane.b32.xlu0 %v430, 125
    %v450 = vpop.permute.xlu0 %449
    %s451 = vtos %v450
    %v452 = vstv %s451
    %v454 = vmul.f32 %v452, %v422
    %v455 = vadd.f32 %v448, %v454
    %v456 = vrot.slane %v95, 4
    %s457 = vtos %v456
    %v458 = vstv %s457
    %v460 = vmul.f32 %v458, %v212
    %v461 = vmul.f32 %v458, %v217
    %v462 = vmax.f32 %v212, 0.0
    %v463 = vmax.f32 %v217, 0.0
    %464 = vrot.lane.b32.xlu0 %v456, 127
    %v465 = vpop.permute.xlu0 %464
    %s466 = vtos %v465
    %v467 = vstv %s466
    %v469 = vmul.f32 %v467, %v462
    %v470 = vmul.f32 %v467, %v463
    %v471 = vadd.f32 %v460, %v469
    %v472 = vadd.f32 %v461, %v470
    %v473 = vtanh.pop %v212
    %v474 = vtanh.pop %v217
    %475 = vrot.lane.b32.xlu0 %v456, 126
    %v476 = vpop.permute.xlu0 %475
    %s477 = vtos %v476
    %v478 = vstv %s477
    %v480 = vmul.f32 %v478, %v473
    %v481 = vmul.f32 %v478, %v474
    %v482 = vadd.f32 %v471, %v480
    %v483 = vadd.f32 %v472, %v481
    %v484 = vxor.u32 %v212, 2147483648
    %v485 = vxor.u32 %v217, 2147483648
    %v486 = vmul.f32 %v484, 1.442695
    %v487 = vpow.pop %v486
    %v488 = vmul.f32 %v485, 1.442695
    %v489 = vpow.pop %v488
    %v490 = vadd.f32 %v487, 1.0
    %v491 = vadd.f32 %v489, 1.0
    %v492 = vrcp.pop %v490
    %v493 = vmul.f32 1.0, %v492
    %v494 = vrcp.pop %v491
    %v495 = vmul.f32 1.0, %v494
    %496 = vrot.lane.b32.xlu0 %v456, 125
    %v497 = vpop.permute.xlu0 %496
    %s498 = vtos %v497
    %v499 = vstv %s498
    %v501 = vmul.f32 %v499, %v493
    %v502 = vmul.f32 %v499, %v495
    %v503 = vadd.f32 %v482, %v501
    %v504 = vadd.f32 %v483, %v502
    %v505 = vrot.slane %v95, 6
    %s506 = vtos %v505
    %v507 = vstv %s506
    %v509 = vmul.f32 %v507, %v301
    %v510 = vmul.f32 %v507, %v306
    %v511 = vmax.f32 %v301, 0.0
    %v512 = vmax.f32 %v306, 0.0
    %513 = vrot.lane.b32.xlu0 %v505, 127
    %v514 = vpop.permute.xlu0 %513
    %s515 = vtos %v514
    %v516 = vstv %s515
    %v518 = vmul.f32 %v516, %v511
    %v519 = vmul.f32 %v516, %v512
    %v520 = vadd.f32 %v509, %v518
    %v521 = vadd.f32 %v510, %v519
    %v522 = vtanh.pop %v301
    %v523 = vtanh.pop %v306
    %524 = vrot.lane.b32.xlu0 %v505, 126
    %v525 = vpop.permute.xlu0 %524
    %s526 = vtos %v525
    %v527 = vstv %s526
    %v529 = vmul.f32 %v527, %v522
    %v530 = vmul.f32 %v527, %v523
    %v531 = vadd.f32 %v520, %v529
    %v532 = vadd.f32 %v521, %v530
    %v533 = vxor.u32 %v301, 2147483648
    %v534 = vxor.u32 %v306, 2147483648
    %v535 = vmul.f32 %v533, 1.442695
    %v536 = vpow.pop %v535
    %v537 = vmul.f32 %v534, 1.442695
    %v538 = vpow.pop %v537
    %v539 = vadd.f32 %v536, 1.0
    %v540 = vadd.f32 %v538, 1.0
    %v541 = vrcp.pop %v539
    %v542 = vmul.f32 1.0, %v541
    %v543 = vrcp.pop %v540
    %v544 = vmul.f32 1.0, %v543
    %545 = vrot.lane.b32.xlu0 %v505, 125
    %v546 = vpop.permute.xlu0 %545
    %s547 = vtos %v546
    %v548 = vstv %s547
    %v550 = vmul.f32 %v548, %v542
    %v551 = vmul.f32 %v548, %v544
    %v552 = vadd.f32 %v531, %v550
    %v553 = vadd.f32 %v532, %v551
    %v554 = vrot.slane %v95, 1
    %s555 = vtos %v554
    %v556 = vstv %s555
    %v558 = vmul.f32 %v556, %v429
    %v559 = vmax.f32 %v429, 0.0
    %560 = vrot.lane.b32.xlu0 %v554, 127
    %v561 = vpop.permute.xlu0 %560
    %s562 = vtos %v561
    %v563 = vstv %s562
    %v565 = vmul.f32 %v563, %v559
    %v566 = vadd.f32 %v558, %v565
    %v567 = vtanh.pop %v429
    %568 = vrot.lane.b32.xlu0 %v554, 126
    %v569 = vpop.permute.xlu0 %568
    %s570 = vtos %v569
    %v571 = vstv %s570
    %v573 = vmul.f32 %v571, %v567
    %v574 = vadd.f32 %v566, %v573
    %v575 = vxor.u32 %v429, 2147483648
    %v576 = vmul.f32 %v575, 1.442695
    %v577 = vpow.pop %v576
    %v578 = vadd.f32 %v577, 1.0
    %v579 = vrcp.pop %v578
    %v580 = vmul.f32 1.0, %v579
    %581 = vrot.lane.b32.xlu0 %v554, 125
    %v582 = vpop.permute.xlu0 %581
    %s583 = vtos %v582
    %v584 = vstv %s583
    %v586 = vmul.f32 %v584, %v580
    %v587 = vadd.f32 %v574, %v586
    %v588 = vrot.slane %v95, 3
    %s589 = vtos %v588
    %v590 = vstv %s589
    %v592 = vmul.f32 %v590, %v455
    %v593 = vmax.f32 %v455, 0.0
    %594 = vrot.lane.b32.xlu0 %v588, 127
    %v595 = vpop.permute.xlu0 %594
    %s596 = vtos %v595
    %v597 = vstv %s596
    %v599 = vmul.f32 %v597, %v593
    %v600 = vadd.f32 %v592, %v599
    %v601 = vtanh.pop %v455
    %602 = vrot.lane.b32.xlu0 %v588, 126
    %v603 = vpop.permute.xlu0 %602
    %s604 = vtos %v603
    %v605 = vstv %s604
    %v607 = vmul.f32 %v605, %v601
    %v608 = vadd.f32 %v600, %v607
    %v609 = vxor.u32 %v455, 2147483648
    %v610 = vmul.f32 %v609, 1.442695
    %v611 = vpow.pop %v610
    %v612 = vadd.f32 %v611, 1.0
    %v613 = vrcp.pop %v612
    %v614 = vmul.f32 1.0, %v613
    %615 = vrot.lane.b32.xlu0 %v588, 125
    %v616 = vpop.permute.xlu0 %615
    %s617 = vtos %v616
    %v618 = vstv %s617
    %v620 = vmul.f32 %v618, %v614
    %v621 = vadd.f32 %v608, %v620
    %v622 = vrot.slane %v95, 5
    %s623 = vtos %v622
    %v624 = vstv %s623
    %v626 = vmul.f32 %v624, %v503
    %v627 = vmul.f32 %v624, %v504
    %v628 = vmax.f32 %v503, 0.0
    %v629 = vmax.f32 %v504, 0.0
    %630 = vrot.lane.b32.xlu0 %v622, 127
    %v631 = vpop.permute.xlu0 %630
    %s632 = vtos %v631
    %v633 = vstv %s632
    %v635 = vmul.f32 %v633, %v628
    %v636 = vmul.f32 %v633, %v629
    %v637 = vadd.f32 %v626, %v635
    %v638 = vadd.f32 %v627, %v636
    %v639 = vtanh.pop %v503
    %v640 = vtanh.pop %v504
    %641 = vrot.lane.b32.xlu0 %v622, 126
    %v642 = vpop.permute.xlu0 %641
    %s643 = vtos %v642
    %v644 = vstv %s643
    %v646 = vmul.f32 %v644, %v639
    %v647 = vmul.f32 %v644, %v640
    %v648 = vadd.f32 %v637, %v646
    %v649 = vadd.f32 %v638, %v647
    %v650 = vxor.u32 %v503, 2147483648
    %v651 = vxor.u32 %v504, 2147483648
    %v652 = vmul.f32 %v650, 1.442695
    %v653 = vpow.pop %v652
    %v654 = vmul.f32 %v651, 1.442695
    %v655 = vpow.pop %v654
    %v656 = vadd.f32 %v653, 1.0
    %v657 = vadd.f32 %v655, 1.0
    %v658 = vrcp.pop %v656
    %v659 = vmul.f32 1.0, %v658
    %v660 = vrcp.pop %v657
    %v661 = vmul.f32 1.0, %v660
    %662 = vrot.lane.b32.xlu0 %v622, 125
    %v663 = vpop.permute.xlu0 %662
    %s664 = vtos %v663
    %v665 = vstv %s664
    %v667 = vmul.f32 %v665, %v659
    %v668 = vmul.f32 %v665, %v661
    %v669 = vadd.f32 %v648, %v667
    %v670 = vadd.f32 %v649, %v668
    %v671 = vrot.slane %v95, 7
    %s672 = vtos %v671
    %v673 = vstv %s672
    %v675 = vmul.f32 %v673, %v552
    %v676 = vmul.f32 %v673, %v553
    %v677 = vmax.f32 %v552, 0.0
    %v678 = vmax.f32 %v553, 0.0
    %679 = vrot.lane.b32.xlu0 %v671, 127
    %v680 = vpop.permute.xlu0 %679
    %s681 = vtos %v680
    %v682 = vstv %s681
    %v684 = vmul.f32 %v682, %v677
    %v685 = vmul.f32 %v682, %v678
    %v686 = vadd.f32 %v675, %v684
    %v687 = vadd.f32 %v676, %v685
    %v688 = vtanh.pop %v552
    %v689 = vtanh.pop %v553
    %690 = vrot.lane.b32.xlu0 %v671, 126
    %v691 = vpop.permute.xlu0 %690
    %s692 = vtos %v691
    %v693 = vstv %s692
    %v695 = vmul.f32 %v693, %v688
    %v696 = vmul.f32 %v693, %v689
    %v697 = vadd.f32 %v686, %v695
    %v698 = vadd.f32 %v687, %v696
    %v699 = vxor.u32 %v552, 2147483648
    %v700 = vxor.u32 %v553, 2147483648
    %v701 = vmul.f32 %v699, 1.442695
    %v702 = vpow.pop %v701
    %v703 = vmul.f32 %v700, 1.442695
    %v704 = vpow.pop %v703
    %v705 = vadd.f32 %v702, 1.0
    %v706 = vadd.f32 %v704, 1.0
    %v707 = vrcp.pop %v705
    %v708 = vmul.f32 1.0, %v707
    %v709 = vrcp.pop %v706
    %v710 = vmul.f32 1.0, %v709
    %711 = vrot.lane.b32.xlu0 %v671, 125
    %v712 = vpop.permute.xlu0 %711
    %s713 = vtos %v712
    %v714 = vstv %s713
    %v716 = vmul.f32 %v714, %v708
    %v717 = vmul.f32 %v714, %v710
    %v718 = vadd.f32 %v697, %v716
    %v719 = vadd.f32 %v698, %v717
    %v720 = vlaneseq
    %v721 = vshrl.u32 %v720, 7
    %v722 = vmul.u32 %v721, 8
    %vm723 = vcmp.ge.s32.totalorder %v101, %v722
    %v724 = vadd.s32 %v722, 8
    %vm725 = vcmp.lt.s32.totalorder %v101, %v724
    %vm726 = vmand %vm723, %vm725
    %v727 = vsel %vm726, 1, 0
    %v728 = vcvt.s32.f32 %v727
    %v729 = vmul.f32 %v728, 0.125
    %vm730 = vcmask 130048
    %v732 = vsel %vm730, %v729, 0
    %734 = vmatprep.subr.mxu0 0.0
    %735 = vmatpush1.msra.mxu0 %v669
    %736 = vmatprep.subr.mxu0 0.0
    %737 = vmatpush1.msra.mxu0 %v670
    %738 = vmatprep.subr.mxu0 0.0
    %739 = vmatpush1.msra.mxu0 0.0
    %740 = vmatprep.subr.mxu0 0.0
    %741 = vmatpush1.msra.mxu0 0.0
    %742 = vmatprep.subr.mxu0 0.0
    %743 = vmatpush1.msra.mxu0 0.0
    %744 = vmatprep.subr.mxu0 0.0
    %745 = vmatpush1.msra.mxu0 0.0
    %746 = vmatprep.subr.mxu0 0.0
    %747 = vmatpush1.msra.mxu0 0.0
    %748 = vmatprep.subr.mxu0 0.0
    %749 = vmatpush1.msra.mxu0 0.0
    %750 = vmatprep.subr.mxu0 0.0
    %751 = vmatpush1.msra.mxu0 0.0
    %752 = vmatprep.subr.mxu0 0.0
    %753 = vmatpush1.msra.mxu0 0.0
    %754 = vmatprep.subr.mxu0 0.0
    %755 = vmatpush1.msra.mxu0 0.0
    %756 = vmatprep.subr.mxu0 0.0
    %757 = vmatpush1.msra.mxu0 0.0
    %758 = vmatprep.subr.mxu0 0.0
    %759 = vmatpush1.msra.mxu0 0.0
    %760 = vmatprep.subr.mxu0 0.0
    %761 = vmatpush1.msra.mxu0 0.0
    %762 = vmatprep.subr.mxu0 0.0
    %763 = vmatpush1.msra.mxu0 0.0
    %764 = vmatprep.subr.mxu0 0.0
    %765 = vmatpush1.msra.mxu0 0.0
    %766 = vmatprep.subr.mxu0 0.0
    %767 = vmatpush1.msra.mxu0 0.0
    %768 = vmatprep.subr.mxu0 0.0
    %769 = vmatpush1.msra.mxu0 0.0
    %770 = vmatprep.subr.mxu0 0.0
    %771 = vmatpush1.msra.mxu0 0.0
    %772 = vmatprep.subr.mxu0 0.0
    %773 = vmatpush1.msra.mxu0 0.0
    %774 = vmatprep.subr.mxu0 0.0
    %775 = vmatpush1.msra.mxu0 0.0
    %776 = vmatprep.subr.mxu0 0.0
    %777 = vmatpush1.msra.mxu0 0.0
    %778 = vmatprep.subr.mxu0 0.0
    %779 = vmatpush1.msra.mxu0 0.0
    %780 = vmatprep.subr.mxu0 0.0
    %781 = vmatpush1.msra.mxu0 0.0
    %782 = vmatprep.subr.mxu0 0.0
    %783 = vmatpush1.msra.mxu0 0.0
    %784 = vmatprep.subr.mxu0 0.0
    %785 = vmatpush1.msra.mxu0 0.0
    %786 = vmatprep.subr.mxu0 0.0
    %787 = vmatpush1.msra.mxu0 0.0
    %788 = vmatprep.subr.mxu0 0.0
    %789 = vmatpush1.msra.mxu0 0.0
    %790 = vmatprep.subr.mxu0 0.0
    %791 = vmatpush1.msra.mxu0 0.0
    %792 = vmatprep.subr.mxu0 0.0
    %793 = vmatpush1.msra.mxu0 0.0
    %794 = vmatprep.subr.mxu0 0.0
    %795 = vmatpush1.msra.mxu0 0.0
    %796 = vmatprep.subr.mxu0 0.0
    %797 = vmatpush1.msra.mxu0 0.0
    %798 = vmatprep.mubr.f32.mxu0 0.0
    %799 = vmatmul.mubr.f32.gmra.mrb[0].mxu0 %v732
    %v800 = vpop.f32.mrb[0].mxu0
    %v801 = vadd.f32 0.0, %v800
    %v802 = vpop.f32.mrb[0].mxu0
    %803 = vdwg.mxu0
    %804 = vmatprep.subr.mxu0 0.0
    %805 = vmatpush1.msra.mxu0 %v718
    %806 = vmatprep.subr.mxu0 0.0
    %807 = vmatpush1.msra.mxu0 %v719
    %808 = vmatprep.subr.mxu0 0.0
    %809 = vmatpush1.msra.mxu0 0.0
    %810 = vmatprep.subr.mxu0 0.0
    %811 = vmatpush1.msra.mxu0 0.0
    %812 = vmatprep.subr.mxu0 0.0
    %813 = vmatpush1.msra.mxu0 0.0
    %814 = vmatprep.subr.mxu0 0.0
    %815 = vmatpush1.msra.mxu0 0.0
    %816 = vmatprep.subr.mxu0 0.0
    %817 = vmatpush1.msra.mxu0 0.0
    %818 = vmatprep.subr.mxu0 0.0
    %819 = vmatpush1.msra.mxu0 0.0
    %820 = vmatprep.subr.mxu0 0.0
    %821 = vmatpush1.msra.mxu0 0.0
    %822 = vmatprep.subr.mxu0 0.0
    %823 = vmatpush1.msra.mxu0 0.0
    %824 = vmatprep.subr.mxu0 0.0
    %825 = vmatpush1.msra.mxu0 0.0
    %826 = vmatprep.subr.mxu0 0.0
    %827 = vmatpush1.msra.mxu0 0.0
    %828 = vmatprep.subr.mxu0 0.0
    %829 = vmatpush1.msra.mxu0 0.0
    %830 = vmatprep.subr.mxu0 0.0
    %831 = vmatpush1.msra.mxu0 0.0
    %832 = vmatprep.subr.mxu0 0.0
    %833 = vmatpush1.msra.mxu0 0.0
    %834 = vmatprep.subr.mxu0 0.0
    %835 = vmatpush1.msra.mxu0 0.0
    %836 = vmatprep.subr.mxu0 0.0
    %837 = vmatpush1.msra.mxu0 0.0
    %838 = vmatprep.subr.mxu0 0.0
    %839 = vmatpush1.msra.mxu0 0.0
    %840 = vmatprep.subr.mxu0 0.0
    %841 = vmatpush1.msra.mxu0 0.0
    %842 = vmatprep.subr.mxu0 0.0
    %843 = vmatpush1.msra.mxu0 0.0
    %844 = vmatprep.subr.mxu0 0.0
    %845 = vmatpush1.msra.mxu0 0.0
    %846 = vmatprep.subr.mxu0 0.0
    %847 = vmatpush1.msra.mxu0 0.0
    %848 = vmatprep.subr.mxu0 0.0
    %849 = vmatpush1.msra.mxu0 0.0
    %850 = vmatprep.subr.mxu0 0.0
    %851 = vmatpush1.msra.mxu0 0.0
    %852 = vmatprep.subr.mxu0 0.0
    %853 = vmatpush1.msra.mxu0 0.0
    %854 = vmatprep.subr.mxu0 0.0
    %855 = vmatpush1.msra.mxu0 0.0
    %856 = vmatprep.subr.mxu0 0.0
    %857 = vmatpush1.msra.mxu0 0.0
    %858 = vmatprep.subr.mxu0 0.0
    %859 = vmatpush1.msra.mxu0 0.0
    %860 = vmatprep.subr.mxu0 0.0
    %861 = vmatpush1.msra.mxu0 0.0
    %862 = vmatprep.subr.mxu0 0.0
    %863 = vmatpush1.msra.mxu0 0.0
    %864 = vmatprep.subr.mxu0 0.0
    %865 = vmatpush1.msra.mxu0 0.0
    %866 = vmatprep.subr.mxu0 0.0
    %867 = vmatpush1.msra.mxu0 0.0
    %868 = vmatprep.mubr.f32.mxu0 0.0
    %869 = vmatmul.mubr.f32.gmra.mrb[0].mxu0 %v732
    %v870 = vpop.f32.mrb[0].mxu0
    %v871 = vadd.f32 0.0, %v870
    %v872 = vpop.f32.mrb[0].mxu0
    %873 = vdwg.mxu0
    %vm874 = vcmask 254976
    %875 = vst.msk [vmem:[#allocation2] sm:$0x3] %vm874, %v587
    %877 = vrot.lane.b32.xlu0 %v801, 32
    %v878 = vpop.permute.xlu0 %877
    %vm880 = vcmask 517376
    %881 = vst.msk [vmem:[#allocation2] sm:$0x3] %vm880, %v878
    %883 = vrot.lane.b32.xlu0 %v871, 64
    %v884 = vpop.permute.xlu0 %883
    %vm886 = vcmask 779776
    %887 = vst.msk [vmem:[#allocation2] sm:$0x3] %vm886, %v884
    %889 = vrot.lane.b32.xlu0 %v621, 64
    %v890 = vpop.permute.xlu0 %889
    %vm892 = vcmask 1042176
    %893 = vst.msk [vmem:[#allocation2] sm:$0x3] %vm892, %v890
    %v894 = vld [vmem:[#allocation2] sm:$0x3]
    %v895 = vld [vmem:[%s7] sm:$0xff]
    %v896 = vld [vmem:[%s7 + $0x8] sm:$0xff]
    %v897 = vld [vmem:[%s7 + $0x10] sm:$0xff]
    %v898 = vld [vmem:[%s7 + $0x18] sm:$0xff]
    %v899 = vld [vmem:[%s7 + $0x20] sm:$0xff]
    %v900 = vld [vmem:[%s7 + $0x28] sm:$0xff]
    %v901 = vld [vmem:[%s7 + $0x30] sm:$0xff]
    %v902 = vld [vmem:[%s7 + $0x38] sm:$0xff]
    %v903 = vld [vmem:[%s7 + $0x40] sm:$0xff]
    %v904 = vld [vmem:[%s7 + $0x48] sm:$0xff]
    %v905 = vld [vmem:[%s7 + $0x50] sm:$0xff]
    %v906 = vld [vmem:[%s7 + $0x58] sm:$0xff]
    %v907 = vld [vmem:[%s7 + $0x60] sm:$0xff]
    %v908 = vld [vmem:[%s7 + $0x68] sm:$0xff]
    %v909 = vld [vmem:[%s7 + $0x70] sm:$0xff]
    %v910 = vld [vmem:[%s7 + $0x78] sm:$0xff]
    %v911 = vld [vmem:[%s8] sm:$0x1]
    %v913 = vlaneseq
    %v914 = vshrl.u32 %v913, 7
    %v915 = vsub.s32 0, %v914
    %v916 = vrot.slane %v911, %v915
    %918 = vmatprep.subr.mxu0 0.0
    %919 = vmatpush1.msra.mxu0 %v895
    %920 = vmatprep.subr.mxu0 0.0
    %921 = vmatpush1.msra.mxu0 %v896
    %922 = vmatprep.subr.mxu0 0.0
    %923 = vmatpush1.msra.mxu0 %v897
    %924 = vmatprep.subr.mxu0 0.0
    %925 = vmatpush1.msra.mxu0 %v898
    %926 = vmatprep.subr.mxu0 0.0
    %927 = vmatpush1.msra.mxu0 %v899
    %928 = vmatprep.subr.mxu0 0.0
    %929 = vmatpush1.msra.mxu0 %v900
    %930 = vmatprep.subr.mxu0 0.0
    %931 = vmatpush1.msra.mxu0 %v901
    %932 = vmatprep.subr.mxu0 0.0
    %933 = vmatpush1.msra.mxu0 %v902
    %934 = vmatprep.subr.mxu0 0.0
    %935 = vmatpush1.msra.mxu0 %v903
    %936 = vmatprep.subr.mxu0 0.0
    %937 = vmatpush1.msra.mxu0 %v904
    %938 = vmatprep.subr.mxu0 0.0
    %939 = vmatpush1.msra.mxu0 %v905
    %940 = vmatprep.subr.mxu0 0.0
    %941 = vmatpush1.msra.mxu0 %v906
    %942 = vmatprep.subr.mxu0 0.0
    %943 = vmatpush1.msra.mxu0 %v907
    %944 = vmatprep.subr.mxu0 0.0
    %945 = vmatpush1.msra.mxu0 %v908
    %946 = vmatprep.subr.mxu0 0.0
    %947 = vmatpush1.msra.mxu0 %v909
    %948 = vmatprep.subr.mxu0 0.0
    %949 = vmatpush1.msra.mxu0 %v910
    %950 = vmatprep.subr.mxu0 0.0
    %951 = vmatpush1.msra.mxu0 0.0
    %952 = vmatprep.subr.mxu0 0.0
    %953 = vmatpush1.msra.mxu0 0.0
    %954 = vmatprep.subr.mxu0 0.0
    %955 = vmatpush1.msra.mxu0 0.0
    %956 = vmatprep.subr.mxu0 0.0
    %957 = vmatpush1.msra.mxu0 0.0
    %958 = vmatprep.subr.mxu0 0.0
    %959 = vmatpush1.msra.mxu0 0.0
    %960 = vmatprep.subr.mxu0 0.0
    %961 = vmatpush1.msra.mxu0 0.0
    %962 = vmatprep.subr.mxu0 0.0
    %963 = vmatpush1.msra.mxu0 0.0
    %964 = vmatprep.subr.mxu0 0.0
    %965 = vmatpush1.msra.mxu0 0.0
    %966 = vmatprep.subr.mxu0 0.0
    %967 = vmatpush1.msra.mxu0 0.0
    %968 = vmatprep.subr.mxu0 0.0
    %969 = vmatpush1.msra.mxu0 0.0
    %970 = vmatprep.subr.mxu0 0.0
    %971 = vmatpush1.msra.mxu0 0.0
    %972 = vmatprep.subr.mxu0 0.0
    %973 = vmatpush1.msra.mxu0 0.0
    %974 = vmatprep.subr.mxu0 0.0
    %975 = vmatpush1.msra.mxu0 0.0
    %976 = vmatprep.subr.mxu0 0.0
    %977 = vmatpush1.msra.mxu0 0.0
    %978 = vmatprep.subr.mxu0 0.0
    %979 = vmatpush1.msra.mxu0 0.0
    %980 = vmatprep.subr.mxu0 0.0
    %981 = vmatpush1.msra.mxu0 0.0
    %982 = vmatprep.mubr.f32.mxu0 0.0
    %983 = vmatmul.mubr.f32.gmra.mrb[0].mxu0 %v894
    %v984 = vpop.f32.mrb[0].mxu0
    %v985 = vadd.f32 %v916, %v984
    %v986 = vpop.f32.mrb[0].mxu0
    %987 = vdwg.mxu0
    %v988 = vmax.f32 %v985, 0.0
    %s990 = vtos %v97
    %v991 = vstv %s990
    %v993 = vmul.f32 %v991, %v988
    %v994 = vmax.f32 %v988, 0.0
    %995 = vrot.lane.b32.xlu0 %v97, 127
    %v996 = vpop.permute.xlu0 %995
    %s997 = vtos %v996
    %v998 = vstv %s997
    %v1000 = vmul.f32 %v998, %v994
    %v1001 = vadd.f32 %v993, %v1000
    %v1002 = vtanh.pop %v988
    %1003 = vrot.lane.b32.xlu0 %v97, 126
    %v1004 = vpop.permute.xlu0 %1003
    %s1005 = vtos %v1004
    %v1006 = vstv %s1005
    %v1008 = vmul.f32 %v1006, %v1002
    %v1009 = vadd.f32 %v1001, %v1008
    %v1010 = vrot.slane %v97, 1
    %s1011 = vtos %v1010
    %v1012 = vstv %s1011
    %v1014 = vmul.f32 %v1012, %v988
    %1015 = vrot.lane.b32.xlu0 %v1010, 127
    %v1016 = vpop.permute.xlu0 %1015
    %s1017 = vtos %v1016
    %v1018 = vstv %s1017
    %v1020 = vmul.f32 %v1018, %v994
    %v1021 = vadd.f32 %v1014, %v1020
    %1022 = vrot.lane.b32.xlu0 %v1010, 126
    %v1023 = vpop.permute.xlu0 %1022
    %s1024 = vtos %v1023
    %v1025 = vstv %s1024
    %v1027 = vmul.f32 %v1025, %v1002
    %v1028 = vadd.f32 %v1021, %v1027
    %1030 = vrot.lane.b32.xlu0 %v1028, 96
    %v1031 = vpop.permute.xlu0 %1030
    %v1033 = vadd.f32 %v1009, %v1031
    %v1034 = vrot.slane %v97, 2
    %s1035 = vtos %v1034
    %v1036 = vstv %s1035
    %v1038 = vmul.f32 %v1036, %v988
    %1039 = vrot.lane.b32.xlu0 %v1034, 127
    %v1040 = vpop.permute.xlu0 %1039
    %s1041 = vtos %v1040
    %v1042 = vstv %s1041
    %v1044 = vmul.f32 %v1042, %v994
    %v1045 = vadd.f32 %v1038, %v1044
    %1046 = vrot.lane.b32.xlu0 %v1034, 126
    %v1047 = vpop.permute.xlu0 %1046
    %s1048 = vtos %v1047
    %v1049 = vstv %s1048
    %v1051 = vmul.f32 %v1049, %v1002
    %v1052 = vadd.f32 %v1045, %v1051
    %1054 = vrot.lane.b32.xlu0 %v1052, 64
    %v1055 = vpop.permute.xlu0 %1054
    %v1057 = vadd.f32 %v1033, %v1055
    %v1058 = vrot.slane %v97, 3
    %s1059 = vtos %v1058
    %v1060 = vstv %s1059
    %v1062 = vmul.f32 %v1060, %v988
    %1063 = vrot.lane.b32.xlu0 %v1058, 127
    %v1064 = vpop.permute.xlu0 %1063
    %s1065 = vtos %v1064
    %v1066 = vstv %s1065
    %v1068 = vmul.f32 %v1066, %v994
    %v1069 = vadd.f32 %v1062, %v1068
    %1070 = vrot.lane.b32.xlu0 %v1058, 126
    %v1071 = vpop.permute.xlu0 %1070
    %s1072 = vtos %v1071
    %v1073 = vstv %s1072
    %v1075 = vmul.f32 %v1073, %v1002
    %v1076 = vadd.f32 %v1069, %v1075
    %1078 = vrot.lane.b32.xlu0 %v1076, 32
    %v1079 = vpop.permute.xlu0 %1078
    %v1081 = vadd.f32 %v1057, %v1079
    %v1082 = vmax.f32 %v1081, 0.0
    %v1084 = vrot.slane %v99, 1
    %s1085 = vtos %v1084
    %v1086 = vstv %s1085
    %v1088 = vmul.f32 %v1086, %v1082
    %v1089 = vtanh.pop %v1081
    %1090 = vrot.lane.b32.xlu0 %v1084, 127
    %v1091 = vpop.permute.xlu0 %1090
    %s1092 = vtos %v1091
    %v1093 = vstv %s1092
    %v1095 = vmul.f32 %v1093, %v1089
    %v1096 = vadd.f32 %v1088, %v1095
    %v1097 = vxor.u32 %v1081, 2147483648
    %v1098 = vmul.f32 %v1097, 1.442695
    %v1099 = vpow.pop %v1098
    %v1100 = vadd.f32 %v1099, 1.0
    %v1101 = vrcp.pop %v1100
    %v1102 = vmul.f32 1.0, %v1101
    %1103 = vrot.lane.b32.xlu0 %v1084, 126
    %v1104 = vpop.permute.xlu0 %1103
    %s1105 = vtos %v1104
    %v1106 = vstv %s1105
    %v1108 = vmul.f32 %v1106, %v1102
    %v1109 = vadd.f32 %v1096, %v1108
    %1110 = vrot.lane.b32.xlu0 %v1084, 125
    %v1111 = vpop.permute.xlu0 %1110
    %s1112 = vtos %v1111
    %v1113 = vstv %s1112
    %v1115 = vmul.f32 %v1113, %v1081
    %v1116 = vadd.f32 %v1109, %v1115
    %v1117 = vrot.slane %v97, 4
    %s1118 = vtos %v1117
    %v1119 = vstv %s1118
    %v1121 = vmul.f32 %v1119, %v988
    %1122 = vrot.lane.b32.xlu0 %v1117, 127
    %v1123 = vpop.permute.xlu0 %1122
    %s1124 = vtos %v1123
    %v1125 = vstv %s1124
    %v1127 = vmul.f32 %v1125, %v994
    %v1128 = vadd.f32 %v1121, %v1127
    %1129 = vrot.lane.b32.xlu0 %v1117, 126
    %v1130 = vpop.permute.xlu0 %1129
    %s1131 = vtos %v1130
    %v1132 = vstv %s1131
    %v1134 = vmul.f32 %v1132, %v1002
    %v1135 = vadd.f32 %v1128, %v1134
    %v1136 = vrot.slane %v97, 5
    %s1137 = vtos %v1136
    %v1138 = vstv %s1137
    %v1140 = vmul.f32 %v1138, %v988
    %1141 = vrot.lane.b32.xlu0 %v1136, 127
    %v1142 = vpop.permute.xlu0 %1141
    %s1143 = vtos %v1142
    %v1144 = vstv %s1143
    %v1146 = vmul.f32 %v1144, %v994
    %v1147 = vadd.f32 %v1140, %v1146
    %1148 = vrot.lane.b32.xlu0 %v1136, 126
    %v1149 = vpop.permute.xlu0 %1148
    %s1150 = vtos %v1149
    %v1151 = vstv %s1150
    %v1153 = vmul.f32 %v1151, %v1002
    %v1154 = vadd.f32 %v1147, %v1153
    %1156 = vrot.lane.b32.xlu0 %v1154, 96
    %v1157 = vpop.permute.xlu0 %1156
    %v1159 = vadd.f32 %v1135, %v1157
    %v1160 = vrot.slane %v97, 6
    %s1161 = vtos %v1160
    %v1162 = vstv %s1161
    %v1164 = vmul.f32 %v1162, %v988
    %1165 = vrot.lane.b32.xlu0 %v1160, 127
    %v1166 = vpop.permute.xlu0 %1165
    %s1167 = vtos %v1166
    %v1168 = vstv %s1167
    %v1170 = vmul.f32 %v1168, %v994
    %v1171 = vadd.f32 %v1164, %v1170
    %1172 = vrot.lane.b32.xlu0 %v1160, 126
    %v1173 = vpop.permute.xlu0 %1172
    %s1174 = vtos %v1173
    %v1175 = vstv %s1174
    %v1177 = vmul.f32 %v1175, %v1002
    %v1178 = vadd.f32 %v1171, %v1177
    %1180 = vrot.lane.b32.xlu0 %v1178, 64
    %v1181 = vpop.permute.xlu0 %1180
    %v1183 = vadd.f32 %v1159, %v1181
    %v1184 = vrot.slane %v97, 7
    %s1185 = vtos %v1184
    %v1186 = vstv %s1185
    %v1188 = vmul.f32 %v1186, %v988
    %1189 = vrot.lane.b32.xlu0 %v1184, 127
    %v1190 = vpop.permute.xlu0 %1189
    %s1191 = vtos %v1190
    %v1192 = vstv %s1191
    %v1194 = vmul.f32 %v1192, %v994
    %v1195 = vadd.f32 %v1188, %v1194
    %1196 = vrot.lane.b32.xlu0 %v1184, 126
    %v1197 = vpop.permute.xlu0 %1196
    %s1198 = vtos %v1197
    %v1199 = vstv %s1198
    %v1201 = vmul.f32 %v1199, %v1002
    %v1202 = vadd.f32 %v1195, %v1201
    %1204 = vrot.lane.b32.xlu0 %v1202, 32
    %v1205 = vpop.permute.xlu0 %1204
    %v1207 = vadd.f32 %v1183, %v1205
    %s1208 = vtos %v99
    %v1209 = vstv %s1208
    %v1211 = vmul.f32 %v1209, %v1116
    %v1212 = vmax.f32 %v1116, 0.0
    %1213 = vrot.lane.b32.xlu0 %v99, 127
    %v1214 = vpop.permute.xlu0 %1213
    %s1215 = vtos %v1214
    %v1216 = vstv %s1215
    %v1218 = vmul.f32 %v1216, %v1212
    %v1219 = vadd.f32 %v1211, %v1218
    %v1220 = vtanh.pop %v1116
    %1221 = vrot.lane.b32.xlu0 %v99, 126
    %v1222 = vpop.permute.xlu0 %1221
    %s1223 = vtos %v1222
    %v1224 = vstv %s1223
    %v1226 = vmul.f32 %v1224, %v1220
    %v1227 = vadd.f32 %v1219, %v1226
    %v1228 = vadd.f32 %v1207, %v1227
    %v1229 = vmax.f32 %v1228, 0.0
    %v1230 = vrot.slane %v99, 2
    %s1231 = vtos %v1230
    %v1232 = vstv %s1231
    %v1234 = vmul.f32 %v1232, %v1229
    %v1235 = vtanh.pop %v1228
    %1236 = vrot.lane.b32.xlu0 %v1230, 127
    %v1237 = vpop.permute.xlu0 %1236
    %s1238 = vtos %v1237
    %v1239 = vstv %s1238
    %v1241 = vmul.f32 %v1239, %v1235
    %v1242 = vadd.f32 %v1234, %v1241
    %v1243 = vxor.u32 %v1228, 2147483648
    %v1244 = vmul.f32 %v1243, 1.442695
    %v1245 = vpow.pop %v1244
    %v1246 = vadd.f32 %v1245, 1.0
    %v1247 = vrcp.pop %v1246
    %v1248 = vmul.f32 1.0, %v1247
    %1249 = vrot.lane.b32.xlu0 %v1230, 126
    %v1250 = vpop.permute.xlu0 %1249
    %s1251 = vtos %v1250
    %v1252 = vstv %s1251
    %v1254 = vmul.f32 %v1252, %v1248
    %v1255 = vadd.f32 %v1242, %v1254
    %1256 = vrot.lane.b32.xlu0 %v1230, 125
    %v1257 = vpop.permute.xlu0 %1256
    %s1258 = vtos %v1257
    %v1259 = vstv %s1258
    %v1261 = vmul.f32 %v1259, %v1228
    %v1262 = vadd.f32 %v1255, %v1261
    %s1263 = sld [smem:[#allocation4]]
    %v1264 = vstv %s1263
    %v1265 = vmul.f32 %v1116, %v1264
    %s1266 = sld [smem:[#allocation4 + $0x1]]
    %v1267 = vstv %s1266
    %v1268 = vmul.f32 %v1262, %v1267
    %v1269 = vadd.f32 %v1265, %v1268
    %s1270 = sld [smem:[#allocation3]]
    %v1271 = vstv %s1270
    %v1272 = vadd.f32 %v1269, %v1271
    %v1273 = vld [vmem:[%s12] sm:$0xff]
    %v1274 = vld [vmem:[%s12 + $0x8] sm:$0xff]
    %v1275 = vld [vmem:[%s12 + $0x10] sm:$0xff]
    %v1276 = vld [vmem:[%s12 + $0x18] sm:$0xff]
    %v1277 = vld [vmem:[%s13] sm:$0x1]
    %v1279 = vlaneseq
    %v1280 = vshrl.u32 %v1279, 7
    %v1281 = vsub.s32 0, %v1280
    %v1282 = vrot.slane %v1277, %v1281
    %v1285 = vsel %vm321, %v1272, 0
    %1287 = vmatprep.subr.mxu0 0.0
    %1288 = vmatpush1.msra.mxu0 %v1273
    %1289 = vmatprep.subr.mxu0 0.0
    %1290 = vmatpush1.msra.mxu0 %v1274
    %1291 = vmatprep.subr.mxu0 0.0
    %1292 = vmatpush1.msra.mxu0 %v1275
    %1293 = vmatprep.subr.mxu0 0.0
    %1294 = vmatpush1.msra.mxu0 %v1276
    %1295 = vmatprep.subr.mxu0 0.0
    %1296 = vmatpush1.msra.mxu0 0.0
    %1297 = vmatprep.subr.mxu0 0.0
    %1298 = vmatpush1.msra.mxu0 0.0
    %1299 = vmatprep.subr.mxu0 0.0
    %1300 = vmatpush1.msra.mxu0 0.0
    %1301 = vmatprep.subr.mxu0 0.0
    %1302 = vmatpush1.msra.mxu0 0.0
    %1303 = vmatprep.subr.mxu0 0.0
    %1304 = vmatpush1.msra.mxu0 0.0
    %1305 = vmatprep.subr.mxu0 0.0
    %1306 = vmatpush1.msra.mxu0 0.0
    %1307 = vmatprep.subr.mxu0 0.0
    %1308 = vmatpush1.msra.mxu0 0.0
    %1309 = vmatprep.subr.mxu0 0.0
    %1310 = vmatpush1.msra.mxu0 0.0
    %1311 = vmatprep.subr.mxu0 0.0
    %1312 = vmatpush1.msra.mxu0 0.0
    %1313 = vmatprep.subr.mxu0 0.0
    %1314 = vmatpush1.msra.mxu0 0.0
    %1315 = vmatprep.subr.mxu0 0.0
    %1316 = vmatpush1.msra.mxu0 0.0
    %1317 = vmatprep.subr.mxu0 0.0
    %1318 = vmatpush1.msra.mxu0 0.0
    %1319 = vmatprep.subr.mxu0 0.0
    %1320 = vmatpush1.msra.mxu0 0.0
    %1321 = vmatprep.subr.mxu0 0.0
    %1322 = vmatpush1.msra.mxu0 0.0
    %1323 = vmatprep.subr.mxu0 0.0
    %1324 = vmatpush1.msra.mxu0 0.0
    %1325 = vmatprep.subr.mxu0 0.0
    %1326 = vmatpush1.msra.mxu0 0.0
    %1327 = vmatprep.subr.mxu0 0.0
    %1328 = vmatpush1.msra.mxu0 0.0
    %1329 = vmatprep.subr.mxu0 0.0
    %1330 = vmatpush1.msra.mxu0 0.0
    %1331 = vmatprep.subr.mxu0 0.0
    %1332 = vmatpush1.msra.mxu0 0.0
    %1333 = vmatprep.subr.mxu0 0.0
    %1334 = vmatpush1.msra.mxu0 0.0
    %1335 = vmatprep.subr.mxu0 0.0
    %1336 = vmatpush1.msra.mxu0 0.0
    %1337 = vmatprep.subr.mxu0 0.0
    %1338 = vmatpush1.msra.mxu0 0.0
    %1339 = vmatprep.subr.mxu0 0.0
    %1340 = vmatpush1.msra.mxu0 0.0
    %1341 = vmatprep.subr.mxu0 0.0
    %1342 = vmatpush1.msra.mxu0 0.0
    %1343 = vmatprep.subr.mxu0 0.0
    %1344 = vmatpush1.msra.mxu0 0.0
    %1345 = vmatprep.subr.mxu0 0.0
    %1346 = vmatpush1.msra.mxu0 0.0
    %1347 = vmatprep.subr.mxu0 0.0
    %1348 = vmatpush1.msra.mxu0 0.0
    %1349 = vmatprep.subr.mxu0 0.0
    %1350 = vmatpush1.msra.mxu0 0.0
    %1351 = vmatprep.mubr.f32.mxu0 0.0
    %1352 = vmatmul.mubr.f32.gmra.mrb[0].mxu0 %v1285
    %v1353 = vpop.f32.mrb[0].mxu0
    %v1354 = vadd.f32 %v1282, %v1353
    %v1355 = vpop.f32.mrb[0].mxu0
    %1356 = vdwg.mxu0
    %vm1357 = vcmask 25600
    %v1358 = vsel %vm1357, %v1354, -inf
    %1359 = vmax.xlane.f32.xlu0 %v1358
    %v1360 = vpop.xlane.xlu0 %1359
    %v1361 = vsub.f32 %v1354, %v1360
    %v1362 = vmul.f32 %v1361, 1.442695
    %v1363 = vpow.pop %v1362
    %v1364 = vsel %vm1357, %v1363, 0.0
    %1365 = vadd.xlane.f32.xlu0 %v1364
    %v1366 = vpop.xlane.xlu0 %1365
    %v1367 = vrcp.pop %v1366
    %v1368 = vmul.f32 %v1363, %v1367
    %1369 = vst.msk [vmem:[#allocation7] sm:$0x3] %vm1357, %v1368
    // Predicated region
    $region62: #{network_prune_forward.1} parent=1 // pred_check
      _
    $region63: #{network_prune_forward.1} parent=1 // pred_check_branch
      %1371 = sbr.rel (0) target = $region65
    $region64: #{network_prune_forward.1} parent=1 // pred_region
      %s1373 = ssub.s32 32, 32
      %1374 = vsyncadd [#allocation5], %s1373
      %s1376 = sshll.u32 [#allocation7], 4
      %s1377 = int_to_ptr.vmem [resolvable:$true] %s1376
      %1379 = dma.vmem_to_hbm [thread:$0]  %s1377, 32, %s14, [#allocation5]
    $region65: #{network_prune_forward.1} parent=1 // pred_fallthru
      _
    // Predicated region
    $region66: #{network_prune_forward.1} parent=1 // pred_check
      _
    $region67: #{network_prune_forward.1} parent=1 // pred_check_branch
      %1381 = sbr.rel (0) target = $region69
    $region68: #{network_prune_forward.1} parent=1 // pred_region
      %1382 = dma.done [#allocation5], 32
    $region69: #{network_prune_forward.1} parent=1 // pred_fallthru
      _
    %1383 = vsyncpa [#allocation5], 1
    %1384 = vsyncpa [#allocation6], 1

</llo_original>
